<compile_context>
chip_gen: v5e
topology: v5e:2x2
jax: 0.10.0
libtpu: 0.0.40
codegen_flags: <defaults>
</compile_context>

<pallas_src>
import functools
import math

import jax
import jax.numpy as jnp
from jax.experimental import pallas as pl
from jax.experimental.pallas import tpu as pltpu


# ----------------------------- in-kernel helpers -----------------------------

def _layer_norm(x, gamma, beta, eps=1e-6):
    # x: (rows, H) f32, gamma/beta: (1, H) f32  (matches torch.nn.LayerNorm, eps=1e-6)
    mean = jnp.mean(x, axis=-1, keepdims=True)
    xc = x - mean
    var = jnp.mean(xc * xc, axis=-1, keepdims=True)
    return xc * jax.lax.rsqrt(var + eps) * gamma + beta


# ------------------------------- Pallas kernels -------------------------------

def _ln_qkv_kernel(x_ref, g_ref, b_ref, wqkv_ref, qkv_ref, *, compute_dtype):
    # LayerNorm1 (f32) + fused QKV projection (bf16 operands, f32 accumulation).
    y = _layer_norm(x_ref[...], g_ref[...], b_ref[...])
    qkv = jnp.dot(y.astype(compute_dtype), wqkv_ref[...],
                  preferred_element_type=jnp.float32)
    qkv_ref[...] = qkv.astype(qkv_ref.dtype)


def _attention_kernel(q_ref, k_ref, v_ref, mask_ref, ctx_ref, *, compute_dtype):
    # q/k/v refs: (heads, S, d_k) bf16 for one batch element; mask ref: (S, S) bf16.
    q = q_ref[...]
    k = k_ref[...]
    v = v_ref[...]

    # Batched-head scores: contraction on the last axes (no explicit transpose).
    s = jnp.einsum('hqd,hkd->hqk', q, k, preferred_element_type=jnp.float32)

    # masked_fill semantics of simple_sdpa, applied once and broadcast over heads.
    masked = mask_ref[...].astype(jnp.float32) != 0.0            # (S, S) bool
    s = jnp.where(masked[None, :, :], -1000000000.0, s)

    # Numerically-stable softmax in f32; reciprocal on the EUP.
    m = jnp.max(s, axis=-1, keepdims=True)
    p = jnp.exp(s - m)
    denom = jnp.sum(p, axis=-1, keepdims=True)
    p = p * pl.reciprocal(denom, approx=True)

    ctx = jnp.einsum('hqk,hkd->hqd', p.astype(compute_dtype), v,
                     preferred_element_type=jnp.float32)
    ctx_ref[...] = ctx.astype(ctx_ref.dtype)


def _out_ffn_kernel(ctx_ref, x_ref, wo_ref, g2_ref, b2_ref,
                    w1_ref, bb1_ref, w2_ref, bb2_ref, o_ref, *, compute_dtype):
    # Output projection + residual + LayerNorm2 + FFN + residual (per row tile).
    att = jnp.dot(ctx_ref[...], wo_ref[...], preferred_element_type=jnp.float32)
    x1 = x_ref[...] + att                                          # residual 1 (f32)

    y2 = _layer_norm(x1, g2_ref[...], b2_ref[...]).astype(compute_dtype)
    h = jnp.dot(y2, w1_ref[...], preferred_element_type=jnp.float32) + bb1_ref[...]
    h = jnp.maximum(h, 0.0).astype(compute_dtype)                  # ReLU
    f = jnp.dot(h, w2_ref[...], preferred_element_type=jnp.float32) + bb2_ref[...]

    o_ref[...] = (x1 + f).astype(o_ref.dtype)                      # residual 2


# --------------------------------- wrapper ------------------------------------

def _const_spec(shape):
    n = len(shape)
    return pl.BlockSpec(shape, lambda *_: (0,) * n)


def encoder_layer(x, mask, params, *, head_size=8, compute_dtype=jnp.bfloat16):
    """x: [B, S, H] f32. mask: [B, S, S] (nonzero = masked). params: dict of f32 weights,
    linear weights already transposed to [in, out] so y @ W == torch y @ W.T."""
    B, S, H = x.shape
    assert H % head_size == 0
    d_k = H // head_size
    scale = float(d_k) ** (-0.5)
    F_ = params['w1'].shape[1]
    cd = compute_dtype

    # Host-side weight prep (once per call): fold scale into Wq, fuse QKV, cast to bf16.
    wqkv = jnp.concatenate(
        [params['wq'] * scale, params['wk'], params['wv']], axis=1).astype(cd)   # (H, 3H)
    wo = params['wo'].astype(cd)
    w1 = params['w1'].astype(cd)
    w2 = params['w2'].astype(cd)
    ln1_g = params['ln1_g'].reshape(1, H).astype(jnp.float32)
    ln1_b = params['ln1_b'].reshape(1, H).astype(jnp.float32)
    ln2_g = params['ln2_g'].reshape(1, H).astype(jnp.float32)
    ln2_b = params['ln2_b'].reshape(1, H).astype(jnp.float32)
    b1 = params['b1'].reshape(1, F_).astype(jnp.float32)
    b2 = params['b2'].reshape(1, H).astype(jnp.float32)

    rows = B * S
    x2d = x.reshape(rows, H).astype(jnp.float32)
    # Row tile: whole batch processed together, tiled in multiples of 8 rows.
    tr = math.gcd(rows, 256) if rows % 8 == 0 else rows
    row_grid = (rows // tr,)
    parallel = pltpu.CompilerParams(dimension_semantics=("parallel",))

    # ---- Kernel A: LayerNorm1 + fused QKV projection ----
    qkv2d = pl.pallas_call(
        functools.partial(_ln_qkv_kernel, compute_dtype=cd),
        out_shape=jax.ShapeDtypeStruct((rows, 3 * H), cd),
        grid=row_grid,
        in_specs=[pl.BlockSpec((tr, H), lambda r: (r, 0)),
                  _const_spec((1, H)), _const_spec((1, H)),
                  _const_spec((H, 3 * H))],
        out_specs=pl.BlockSpec((tr, 3 * H), lambda r: (r, 0)),
        compiler_params=parallel,
    )(x2d, ln1_g, ln1_b, wqkv)

    # ---- wrapper-side head split (layout plumbing only) ----
    def split_heads(t):  # (rows, H) -> (B, heads, S, d_k)
        return t.reshape(B, S, head_size, d_k).transpose(0, 2, 1, 3)

    qh = split_heads(qkv2d[:, :H])
    kh = split_heads(qkv2d[:, H:2 * H])
    vh = split_heads(qkv2d[:, 2 * H:])
    mask_c = mask.astype(cd)            # bf16 mask stream (half the HBM traffic of f32)

    # ---- Kernel B: batched-head attention, one grid step per batch element ----
    qkv_spec = pl.BlockSpec((None, head_size, S, d_k), lambda b: (b, 0, 0, 0))
    ctx_h = pl.pallas_call(
        functools.partial(_attention_kernel, compute_dtype=cd),
        out_shape=jax.ShapeDtypeStruct((B, head_size, S, d_k), cd),
        grid=(B,),
        in_specs=[qkv_spec, qkv_spec, qkv_spec,
                  pl.BlockSpec((None, S, S), lambda b: (b, 0, 0))],
        out_specs=pl.BlockSpec((None, head_size, S, d_k), lambda b: (b, 0, 0, 0)),
        compiler_params=parallel,
    )(qh, kh, vh, mask_c)

    # ---- wrapper-side head merge back to a lane-dense (rows, H) slab ----
    ctx2d = ctx_h.transpose(0, 2, 1, 3).reshape(rows, H)

    # ---- Kernel C: output projection + residual + LayerNorm2 + FFN + residual ----
    out2d = pl.pallas_call(
        functools.partial(_out_ffn_kernel, compute_dtype=cd),
        out_shape=jax.ShapeDtypeStruct((rows, H), jnp.float32),
        grid=row_grid,
        in_specs=[pl.BlockSpec((tr, H), lambda r: (r, 0)),   # attention context (bf16)
                  pl.BlockSpec((tr, H), lambda r: (r, 0)),   # residual input x (f32)
                  _const_spec((H, H)),                       # Wo
                  _const_spec((1, H)), _const_spec((1, H)),  # LN2 gamma / beta
                  _const_spec((H, F_)), _const_spec((1, F_)),  # FFN layer1 W / b
                  _const_spec((F_, H)), _const_spec((1, H))],  # FFN layer2 W / b
        out_specs=pl.BlockSpec((tr, H), lambda r: (r, 0)),
        compiler_params=parallel,
    )(ctx2d, x2d, wo, ln2_g, ln2_b, w1, b1, w2, b2)

    return out2d.reshape(B, S, H).astype(x.dtype)


# ------------------------- pure-JAX reference (mirror) -------------------------

def _reference(x, mask, params, *, head_size=8, compute_dtype=jnp.bfloat16):
    """Mirrors the PyTorch EncoderLayer forward with the same bf16-operand / f32-accumulation
    mixed-precision policy as the kernels (strict-f32 PyTorch differs by ~1e-2)."""
    B, S, H = x.shape
    d_k = H // head_size
    scale = float(d_k) ** (-0.5)
    cd = compute_dtype
    f32 = jnp.float32

    def ln(t, g, b):
        mu = jnp.mean(t, axis=-1, keepdims=True)
        tc = t - mu
        var = jnp.mean(tc * tc, axis=-1, keepdims=True)
        return tc * jax.lax.rsqrt(var + 1e-6) * g + b

    wq = (params['wq'] * scale).astype(cd)
    wk = params['wk'].astype(cd)
    wv = params['wv'].astype(cd)
    wo = params['wo'].astype(cd)
    w1 = params['w1'].astype(cd)
    w2 = params['w2'].astype(cd)

    y = ln(x, params['ln1_g'], params['ln1_b']).astype(cd)
    q = jnp.dot(y, wq, preferred_element_type=f32).astype(cd)
    k = jnp.dot(y, wk, preferred_element_type=f32).astype(cd)
    v = jnp.dot(y, wv, preferred_element_type=f32).astype(cd)

    def split(t):
        return t.reshape(B, S, head_size, d_k).transpose(0, 2, 1, 3)

    qh, kh, vh = split(q), split(k), split(v)
    s = jnp.einsum('bhqd,bhkd->bhqk', qh, kh, preferred_element_type=f32)
    s = jnp.where((mask != 0.0)[:, None, :, :], -1000000000.0, s)
    p = jax.nn.softmax(s, axis=-1)
    ctx = jnp.einsum('bhqk,bhkd->bhqd', p.astype(cd), vh,
                     preferred_element_type=f32).astype(cd)
    ctx = ctx.transpose(0, 2, 1, 3).reshape(B, S, H)

    att = jnp.dot(ctx, wo, preferred_element_type=f32)
    x1 = x + att
    y2 = ln(x1, params['ln2_g'], params['ln2_b']).astype(cd)
    h = jnp.dot(y2, w1, preferred_element_type=f32) + params['b1']
    h = jnp.maximum(h, 0.0).astype(cd)
    f = jnp.dot(h, w2, preferred_element_type=f32) + params['b2']
    return x1 + f


# ----------------------------------- demo --------------------------------------

if __name__ == "__main__":
    B, S, H = 2, 16, 64         # head_size=8 is the module default -> d_k = 8
    F_ = 128                    # filter_size
    head_size = 8

    key = jax.random.PRNGKey(0)
    keys = jax.random.split(key, 12)

    x = jax.random.normal(keys[0], (B, S, H), dtype=jnp.float32)
    # mask: nonzero => masked (mirrors torch masked_fill with a bool mask)
    mask = (jax.random.uniform(keys[1], (B, S, S)) < 0.2).astype(jnp.float32)

    def xavier(k, shape):
        bound = (6.0 / (shape[0] + shape[1])) ** 0.5
        return jax.random.uniform(k, shape, minval=-bound, maxval=bound,
                                  dtype=jnp.float32)

    params = dict(
        wq=xavier(keys[2], (H, H)), wk=xavier(keys[3], (H, H)),
        wv=xavier(keys[4], (H, H)), wo=xavier(keys[5], (H, H)),
        w1=xavier(keys[6], (H, F_)), w2=xavier(keys[7], (F_, H)),
        b1=0.02 * jax.random.normal(keys[8], (F_,), dtype=jnp.float32),
        b2=0.02 * jax.random.normal(keys[9], (H,), dtype=jnp.float32),
        ln1_g=1.0 + 0.05 * jax.random.normal(keys[10], (H,), dtype=jnp.float32),
        ln1_b=jnp.zeros((H,), jnp.float32),
        ln2_g=1.0 + 0.05 * jax.random.normal(keys[11], (H,), dtype=jnp.float32),
        ln2_b=jnp.zeros((H,), jnp.float32),
    )

    run = jax.jit(functools.partial(encoder_layer, head_size=head_size))
    out = jax.block_until_ready(run(x, mask, params))

    ref = _reference(x, mask, params, head_size=head_size)
    assert out.shape == (B, S, H)
    max_err = float(jnp.max(jnp.abs(out - ref)))
    assert jnp.allclose(out, ref, atol=3e-2, rtol=3e-2), max_err

    print("KERNEL_OK")
</pallas_src>

<mosaic_0001>
module attributes {stable_mosaic.version = 11 : i64} {
  func.func @_ln_qkv_kernel(%arg0: i32, %arg1: memref<32x64xf32, #tpu.memory_space<vmem>>, %arg2: memref<1x64xf32, #tpu.memory_space<vmem>>, %arg3: memref<1x64xf32, #tpu.memory_space<vmem>>, %arg4: memref<64x192xbf16, #tpu.memory_space<vmem>>, %arg5: memref<32x192xbf16, #tpu.memory_space<vmem>>) attributes {dimension_semantics = [#tpu.dimension_semantics<parallel>], iteration_bounds = array<i64: 1>, scalar_prefetch = 0 : i64, scratch_operands = 0 : i64, tpu.core_type = #tpu.core_type<tc>, window_params = [{transform_indices = @transform_0, window_bounds = array<i64: 32, 64>}, {pipeline_mode = #tpu.pipeline_mode<synchronous>, transform_indices = @transform_1, window_bounds = array<i64: 1, 64>}, {pipeline_mode = #tpu.pipeline_mode<synchronous>, transform_indices = @transform_2, window_bounds = array<i64: 1, 64>}, {pipeline_mode = #tpu.pipeline_mode<synchronous>, transform_indices = @transform_3, window_bounds = array<i64: 64, 192>}, {transform_indices = @transform_4, window_bounds = array<i64: 32, 192>}]} {
    %c0 = arith.constant 0 : index
    %c0_0 = arith.constant 0 : index
    %0 = vector.load %arg1[%c0, %c0_0] : memref<32x64xf32, #tpu.memory_space<vmem>>, vector<32x64xf32>
    %c0_1 = arith.constant 0 : index
    %c0_2 = arith.constant 0 : index
    %1 = vector.load %arg2[%c0_1, %c0_2] : memref<1x64xf32, #tpu.memory_space<vmem>>, vector<1x64xf32>
    %c0_3 = arith.constant 0 : index
    %c0_4 = arith.constant 0 : index
    %2 = vector.load %arg3[%c0_3, %c0_4] : memref<1x64xf32, #tpu.memory_space<vmem>>, vector<1x64xf32>
    %cst = arith.constant dense<0.000000e+00> : vector<32xf32>
    %3 = vector.multi_reduction <add>, %0, %cst [1] : vector<32x64xf32> to vector<32xf32>
    %4 = vector.shape_cast %3 : vector<32xf32> to vector<32x1xf32>
    %cst_5 = arith.constant 6.400000e+01 : f32
    %5 = vector.broadcast %cst_5 : f32 to vector<32x1xf32>
    %6 = arith.divf %4, %5 : vector<32x1xf32>
    %7 = vector.broadcast %6 : vector<32x1xf32> to vector<32x64xf32>
    %8 = arith.subf %0, %7 : vector<32x64xf32>
    %9 = arith.mulf %8, %8 : vector<32x64xf32>
    %cst_6 = arith.constant dense<0.000000e+00> : vector<32xf32>
    %10 = vector.multi_reduction <add>, %9, %cst_6 [1] : vector<32x64xf32> to vector<32xf32>
    %11 = vector.shape_cast %10 : vector<32xf32> to vector<32x1xf32>
    %cst_7 = arith.constant 6.400000e+01 : f32
    %12 = vector.broadcast %cst_7 : f32 to vector<32x1xf32>
    %13 = arith.divf %11, %12 : vector<32x1xf32>
    %cst_8 = arith.constant 9.99999997E-7 : f32
    %14 = vector.broadcast %cst_8 : f32 to vector<32x1xf32>
    %15 = arith.addf %13, %14 : vector<32x1xf32>
    %16 = math.rsqrt %15 : vector<32x1xf32>
    %17 = vector.broadcast %16 : vector<32x1xf32> to vector<32x64xf32>
    %18 = arith.mulf %8, %17 : vector<32x64xf32>
    %19 = vector.broadcast %1 : vector<1x64xf32> to vector<32x64xf32>
    %20 = arith.mulf %18, %19 : vector<32x64xf32>
    %21 = vector.broadcast %2 : vector<1x64xf32> to vector<32x64xf32>
    %22 = arith.addf %20, %21 : vector<32x64xf32>
    %23 = arith.truncf %22 : vector<32x64xf32> to vector<32x64xbf16>
    %c0_9 = arith.constant 0 : index
    %c0_10 = arith.constant 0 : index
    %24 = vector.load %arg4[%c0_9, %c0_10] : memref<64x192xbf16, #tpu.memory_space<vmem>>, vector<64x192xbf16>
    %cst_11 = arith.constant dense<0.000000e+00> : vector<32x192xf32>
    %25 = tpu.matmul %23, %24, %cst_11 {dimension_numbers = #tpu.dot_dimension_numbers<[1], [0], [0], [1], [0, 0, 1, 1], [], []>} : vector<32x64xbf16>, vector<64x192xbf16>, vector<32x192xf32> -> vector<32x192xf32>
    %26 = arith.truncf %25 : vector<32x192xf32> to vector<32x192xbf16>
    %c0_12 = arith.constant 0 : index
    %c0_13 = arith.constant 0 : index
    %27 = vector.load %arg5[%c0_12, %c0_13] : memref<32x192xbf16, #tpu.memory_space<vmem>>, vector<32x192xbf16>
    tpu.vector_store %arg5[%c0_12, %c0_13], %26 {strides = array<i32>} : memref<32x192xbf16, #tpu.memory_space<vmem>>, vector<32x192xbf16>,
    return
  }
  func.func @transform_0(%arg0: i32) -> (i32, i32) {
    %c0_i32 = arith.constant 0 : i32
    %c0_i32_0 = arith.constant 0 : i32
    return %arg0, %c0_i32 : i32, i32
  }
  func.func @transform_1(%arg0: i32) -> (i32, i32) {
    %c0_i32 = arith.constant 0 : i32
    %c0_i32_0 = arith.constant 0 : i32
    %c0_i32_1 = arith.constant 0 : i32
    return %c0_i32, %c0_i32_0 : i32, i32
  }
  func.func @transform_2(%arg0: i32) -> (i32, i32) {
    %c0_i32 = arith.constant 0 : i32
    %c0_i32_0 = arith.constant 0 : i32
    %c0_i32_1 = arith.constant 0 : i32
    return %c0_i32, %c0_i32_0 : i32, i32
  }
  func.func @transform_3(%arg0: i32) -> (i32, i32) {
    %c0_i32 = arith.constant 0 : i32
    %c0_i32_0 = arith.constant 0 : i32
    %c0_i32_1 = arith.constant 0 : i32
    return %c0_i32, %c0_i32_0 : i32, i32
  }
  func.func @transform_4(%arg0: i32) -> (i32, i32) {
    %c0_i32 = arith.constant 0 : i32
    %c0_i32_0 = arith.constant 0 : i32
    return %arg0, %c0_i32 : i32, i32
  }
}

module attributes {stable_mosaic.version = 11 : i64} {
  func.func @_attention_kernel(%arg0: i32, %arg1: memref<1x8x16x8xbf16, #tpu.memory_space<vmem>>, %arg2: memref<1x8x16x8xbf16, #tpu.memory_space<vmem>>, %arg3: memref<1x8x16x8xbf16, #tpu.memory_space<vmem>>, %arg4: memref<1x16x16xbf16, #tpu.memory_space<vmem>>, %arg5: memref<1x8x16x8xbf16, #tpu.memory_space<vmem>>) attributes {dimension_semantics = [#tpu.dimension_semantics<parallel>], iteration_bounds = array<i64: 2>, scalar_prefetch = 0 : i64, scratch_operands = 0 : i64, tpu.core_type = #tpu.core_type<tc>, window_params = [{transform_indices = @transform_0, window_bounds = array<i64: 1, 8, 16, 8>}, {transform_indices = @transform_1, window_bounds = array<i64: 1, 8, 16, 8>}, {transform_indices = @transform_2, window_bounds = array<i64: 1, 8, 16, 8>}, {transform_indices = @transform_3, window_bounds = array<i64: 1, 16, 16>}, {transform_indices = @transform_4, window_bounds = array<i64: 1, 8, 16, 8>}]} {
    %c0 = arith.constant 0 : index
    %c0_0 = arith.constant 0 : index
    %c0_1 = arith.constant 0 : index
    %c0_2 = arith.constant 0 : index
    %0 = vector.load %arg1[%c0, %c0_0, %c0_1, %c0_2] : memref<1x8x16x8xbf16, #tpu.memory_space<vmem>>, vector<1x8x16x8xbf16>
    %1 = vector.shape_cast %0 : vector<1x8x16x8xbf16> to vector<8x16x8xbf16>
    %c0_3 = arith.constant 0 : index
    %c0_4 = arith.constant 0 : index
    %c0_5 = arith.constant 0 : index
    %c0_6 = arith.constant 0 : index
    %2 = vector.load %arg2[%c0_3, %c0_4, %c0_5, %c0_6] : memref<1x8x16x8xbf16, #tpu.memory_space<vmem>>, vector<1x8x16x8xbf16>
    %3 = vector.shape_cast %2 : vector<1x8x16x8xbf16> to vector<8x16x8xbf16>
    %c0_7 = arith.constant 0 : index
    %c0_8 = arith.constant 0 : index
    %c0_9 = arith.constant 0 : index
    %c0_10 = arith.constant 0 : index
    %4 = vector.load %arg3[%c0_7, %c0_8, %c0_9, %c0_10] : memref<1x8x16x8xbf16, #tpu.memory_space<vmem>>, vector<1x8x16x8xbf16>
    %5 = vector.shape_cast %4 : vector<1x8x16x8xbf16> to vector<8x16x8xbf16>
    "tpu.trace_start"() <{level = 10 : i32, message = "hqd,hkd->hqk"}> : () -> ()
    %cst = arith.constant dense<0.000000e+00> : vector<8x16x16xf32>
    %6 = tpu.matmul %1, %3, %cst {dimension_numbers = #tpu.dot_dimension_numbers<[2], [2], [1], [1], [0, 0, 0, 1, 1, 1], [0], [0]>} : vector<8x16x8xbf16>, vector<8x16x8xbf16>, vector<8x16x16xf32> -> vector<8x16x16xf32>
    "tpu.trace_stop"() : () -> ()
    %c0_11 = arith.constant 0 : index
    %c0_12 = arith.constant 0 : index
    %c0_13 = arith.constant 0 : index
    %7 = vector.load %arg4[%c0_11, %c0_12, %c0_13] : memref<1x16x16xbf16, #tpu.memory_space<vmem>>, vector<1x16x16xbf16>
    %8 = vector.shape_cast %7 : vector<1x16x16xbf16> to vector<16x16xbf16>
    %9 = arith.extf %8 : vector<16x16xbf16> to vector<16x16xf32>
    %cst_14 = arith.constant 0.000000e+00 : f32
    %10 = vector.broadcast %cst_14 : f32 to vector<16x16xf32>
    %11 = arith.cmpf one, %9, %10 : vector<16x16xf32>
    %12 = vector.shape_cast %11 : vector<16x16xi1> to vector<1x16x16xi1>
    %cst_15 = arith.constant -1.000000e+09 : f32
    %13 = vector.shape_cast %12 : vector<1x16x16xi1> to vector<1x16x16xi1>
    %14 = vector.broadcast %13 : vector<1x16x16xi1> to vector<8x16x16xi1>
    %15 = vector.broadcast %cst_15 : f32 to vector<8x16x16xf32>
    %16 = arith.select %14, %15, %6 : vector<8x16x16xi1>, vector<8x16x16xf32>
    %cst_16 = arith.constant dense<0xFF800000> : vector<8x16xf32>
    %17 = vector.multi_reduction <maximumf>, %16, %cst_16 [2] : vector<8x16x16xf32> to vector<8x16xf32>
    %18 = vector.shape_cast %17 : vector<8x16xf32> to vector<8x16x1xf32>
    %19 = vector.broadcast %18 : vector<8x16x1xf32> to vector<8x16x16xf32>
    %20 = arith.subf %16, %19 : vector<8x16x16xf32>
    %21 = math.exp %20 : vector<8x16x16xf32>
    %cst_17 = arith.constant dense<0.000000e+00> : vector<8x16xf32>
    %22 = vector.multi_reduction <add>, %21, %cst_17 [2] : vector<8x16x16xf32> to vector<8x16xf32>
    %23 = vector.shape_cast %22 : vector<8x16xf32> to vector<8x16x1xf32>
    %24 = tpu.reciprocal %23 {approx = true} : vector<8x16x1xf32> -> vector<8x16x1xf32>
    %25 = vector.broadcast %24 : vector<8x16x1xf32> to vector<8x16x16xf32>
    %26 = arith.mulf %21, %25 : vector<8x16x16xf32>
    %27 = arith.truncf %26 : vector<8x16x16xf32> to vector<8x16x16xbf16>
    "tpu.trace_start"() <{level = 10 : i32, message = "hqk,hkd->hqd"}> : () -> ()
    %cst_18 = arith.constant dense<0.000000e+00> : vector<8x16x8xf32>
    %28 = tpu.matmul %27, %5, %cst_18 {dimension_numbers = #tpu.dot_dimension_numbers<[2], [1], [1], [2], [0, 0, 0, 1, 1, 2], [0], [0]>} : vector<8x16x16xbf16>, vector<8x16x8xbf16>, vector<8x16x8xf32> -> vector<8x16x8xf32>
    "tpu.trace_stop"() : () -> ()
    %29 = arith.truncf %28 : vector<8x16x8xf32> to vector<8x16x8xbf16>
    %c0_19 = arith.constant 0 : index
    %c0_20 = arith.constant 0 : index
    %c0_21 = arith.constant 0 : index
    %c0_22 = arith.constant 0 : index
    %30 = vector.load %arg5[%c0_19, %c0_20, %c0_21, %c0_22] : memref<1x8x16x8xbf16, #tpu.memory_space<vmem>>, vector<1x8x16x8xbf16>
    %31 = vector.shape_cast %30 : vector<1x8x16x8xbf16> to vector<8x16x8xbf16>
    %32 = vector.shape_cast %29 : vector<8x16x8xbf16> to vector<1x8x16x8xbf16>
    tpu.vector_store %arg5[%c0_19, %c0_20, %c0_21, %c0_22], %32 {strides = array<i32>} : memref<1x8x16x8xbf16, #tpu.memory_space<vmem>>, vector<1x8x16x8xbf16>,
    return
  }
  func.func @transform_0(%arg0: i32) -> (i32, i32, i32, i32) {
    %c0_i32 = arith.constant 0 : i32
    %c0_i32_0 = arith.constant 0 : i32
    %c0_i32_1 = arith.constant 0 : i32
    %c0_i32_2 = arith.constant 0 : i32
    return %arg0, %c0_i32, %c0_i32_0, %c0_i32_1 : i32, i32, i32, i32
  }
  func.func @transform_1(%arg0: i32) -> (i32, i32, i32, i32) {
    %c0_i32 = arith.constant 0 : i32
    %c0_i32_0 = arith.constant 0 : i32
    %c0_i32_1 = arith.constant 0 : i32
    %c0_i32_2 = arith.constant 0 : i32
    return %arg0, %c0_i32, %c0_i32_0, %c0_i32_1 : i32, i32, i32, i32
  }
  func.func @transform_2(%arg0: i32) -> (i32, i32, i32, i32) {
    %c0_i32 = arith.constant 0 : i32
    %c0_i32_0 = arith.constant 0 : i32
    %c0_i32_1 = arith.constant 0 : i32
    %c0_i32_2 = arith.constant 0 : i32
    return %arg0, %c0_i32, %c0_i32_0, %c0_i32_1 : i32, i32, i32, i32
  }
  func.func @transform_3(%arg0: i32) -> (i32, i32, i32) {
    %c0_i32 = arith.constant 0 : i32
    %c0_i32_0 = arith.constant 0 : i32
    %c0_i32_1 = arith.constant 0 : i32
    return %arg0, %c0_i32, %c0_i32_0 : i32, i32, i32
  }
  func.func @transform_4(%arg0: i32) -> (i32, i32, i32, i32) {
    %c0_i32 = arith.constant 0 : i32
    %c0_i32_0 = arith.constant 0 : i32
    %c0_i32_1 = arith.constant 0 : i32
    %c0_i32_2 = arith.constant 0 : i32
    return %arg0, %c0_i32, %c0_i32_0, %c0_i32_1 : i32, i32, i32, i32
  }
}

module attributes {stable_mosaic.version = 11 : i64} {
  func.func @_out_ffn_kernel(%arg0: i32, %arg1: memref<32x64xbf16, #tpu.memory_space<vmem>>, %arg2: memref<32x64xf32, #tpu.memory_space<vmem>>, %arg3: memref<64x64xbf16, #tpu.memory_space<vmem>>, %arg4: memref<1x64xf32, #tpu.memory_space<vmem>>, %arg5: memref<1x64xf32, #tpu.memory_space<vmem>>, %arg6: memref<64x128xbf16, #tpu.memory_space<vmem>>, %arg7: memref<1x128xf32, #tpu.memory_space<vmem>>, %arg8: memref<128x64xbf16, #tpu.memory_space<vmem>>, %arg9: memref<1x64xf32, #tpu.memory_space<vmem>>, %arg10: memref<32x64xf32, #tpu.memory_space<vmem>>) attributes {dimension_semantics = [#tpu.dimension_semantics<parallel>], iteration_bounds = array<i64: 1>, scalar_prefetch = 0 : i64, scratch_operands = 0 : i64, tpu.core_type = #tpu.core_type<tc>, window_params = [{transform_indices = @transform_0, window_bounds = array<i64: 32, 64>}, {transform_indices = @transform_1, window_bounds = array<i64: 32, 64>}, {pipeline_mode = #tpu.pipeline_mode<synchronous>, transform_indices = @transform_2, window_bounds = array<i64: 64, 64>}, {pipeline_mode = #tpu.pipeline_mode<synchronous>, transform_indices = @transform_3, window_bounds = array<i64: 1, 64>}, {pipeline_mode = #tpu.pipeline_mode<synchronous>, transform_indices = @transform_4, window_bounds = array<i64: 1, 64>}, {pipeline_mode = #tpu.pipeline_mode<synchronous>, transform_indices = @transform_5, window_bounds = array<i64: 64, 128>}, {pipeline_mode = #tpu.pipeline_mode<synchronous>, transform_indices = @transform_6, window_bounds = array<i64: 1, 128>}, {pipeline_mode = #tpu.pipeline_mode<synchronous>, transform_indices = @transform_7, window_bounds = array<i64: 128, 64>}, {pipeline_mode = #tpu.pipeline_mode<synchronous>, transform_indices = @transform_8, window_bounds = array<i64: 1, 64>}, {transform_indices = @transform_9, window_bounds = array<i64: 32, 64>}]} {
    %c0 = arith.constant 0 : index
    %c0_0 = arith.constant 0 : index
    %0 = vector.load %arg1[%c0, %c0_0] : memref<32x64xbf16, #tpu.memory_space<vmem>>, vector<32x64xbf16>
    %c0_1 = arith.constant 0 : index
    %c0_2 = arith.constant 0 : index
    %1 = vector.load %arg3[%c0_1, %c0_2] : memref<64x64xbf16, #tpu.memory_space<vmem>>, vector<64x64xbf16>
    %cst = arith.constant dense<0.000000e+00> : vector<32x64xf32>
    %2 = tpu.matmul %0, %1, %cst {dimension_numbers = #tpu.dot_dimension_numbers<[1], [0], [0], [1], [0, 0, 1, 1], [], []>} : vector<32x64xbf16>, vector<64x64xbf16>, vector<32x64xf32> -> vector<32x64xf32>
    %c0_3 = arith.constant 0 : index
    %c0_4 = arith.constant 0 : index
    %3 = vector.load %arg2[%c0_3, %c0_4] : memref<32x64xf32, #tpu.memory_space<vmem>>, vector<32x64xf32>
    %4 = arith.addf %3, %2 : vector<32x64xf32>
    %c0_5 = arith.constant 0 : index
    %c0_6 = arith.constant 0 : index
    %5 = vector.load %arg4[%c0_5, %c0_6] : memref<1x64xf32, #tpu.memory_space<vmem>>, vector<1x64xf32>
    %c0_7 = arith.constant 0 : index
    %c0_8 = arith.constant 0 : index
    %6 = vector.load %arg5[%c0_7, %c0_8] : memref<1x64xf32, #tpu.memory_space<vmem>>, vector<1x64xf32>
    %cst_9 = arith.constant dense<0.000000e+00> : vector<32xf32>
    %7 = vector.multi_reduction <add>, %4, %cst_9 [1] : vector<32x64xf32> to vector<32xf32>
    %8 = vector.shape_cast %7 : vector<32xf32> to vector<32x1xf32>
    %cst_10 = arith.constant 6.400000e+01 : f32
    %9 = vector.broadcast %cst_10 : f32 to vector<32x1xf32>
    %10 = arith.divf %8, %9 : vector<32x1xf32>
    %11 = vector.broadcast %10 : vector<32x1xf32> to vector<32x64xf32>
    %12 = arith.subf %4, %11 : vector<32x64xf32>
    %13 = arith.mulf %12, %12 : vector<32x64xf32>
    %cst_11 = arith.constant dense<0.000000e+00> : vector<32xf32>
    %14 = vector.multi_reduction <add>, %13, %cst_11 [1] : vector<32x64xf32> to vector<32xf32>
    %15 = vector.shape_cast %14 : vector<32xf32> to vector<32x1xf32>
    %cst_12 = arith.constant 6.400000e+01 : f32
    %16 = vector.broadcast %cst_12 : f32 to vector<32x1xf32>
    %17 = arith.divf %15, %16 : vector<32x1xf32>
    %cst_13 = arith.constant 9.99999997E-7 : f32
    %18 = vector.broadcast %cst_13 : f32 to vector<32x1xf32>
    %19 = arith.addf %17, %18 : vector<32x1xf32>
    %20 = math.rsqrt %19 : vector<32x1xf32>
    %21 = vector.broadcast %20 : vector<32x1xf32> to vector<32x64xf32>
    %22 = arith.mulf %12, %21 : vector<32x64xf32>
    %23 = vector.broadcast %5 : vector<1x64xf32> to vector<32x64xf32>
    %24 = arith.mulf %22, %23 : vector<32x64xf32>
    %25 = vector.broadcast %6 : vector<1x64xf32> to vector<32x64xf32>
    %26 = arith.addf %24, %25 : vector<32x64xf32>
    %27 = arith.truncf %26 : vector<32x64xf32> to vector<32x64xbf16>
    %c0_14 = arith.constant 0 : index
    %c0_15 = arith.constant 0 : index
    %28 = vector.load %arg6[%c0_14, %c0_15] : memref<64x128xbf16, #tpu.memory_space<vmem>>, vector<64x128xbf16>
    %cst_16 = arith.constant dense<0.000000e+00> : vector<32x128xf32>
    %29 = tpu.matmul %27, %28, %cst_16 {dimension_numbers = #tpu.dot_dimension_numbers<[1], [0], [0], [1], [0, 0, 1, 1], [], []>} : vector<32x64xbf16>, vector<64x128xbf16>, vector<32x128xf32> -> vector<32x128xf32>
    %c0_17 = arith.constant 0 : index
    %c0_18 = arith.constant 0 : index
    %30 = vector.load %arg7[%c0_17, %c0_18] : memref<1x128xf32, #tpu.memory_space<vmem>>, vector<1x128xf32>
    %31 = vector.broadcast %30 : vector<1x128xf32> to vector<32x128xf32>
    %32 = arith.addf %29, %31 : vector<32x128xf32>
    %cst_19 = arith.constant 0.000000e+00 : f32
    %33 = vector.broadcast %cst_19 : f32 to vector<32x128xf32>
    %34 = arith.maximumf %32, %33 : vector<32x128xf32>
    %35 = arith.truncf %34 : vector<32x128xf32> to vector<32x128xbf16>
    %c0_20 = arith.constant 0 : index
    %c0_21 = arith.constant 0 : index
    %36 = vector.load %arg8[%c0_20, %c0_21] : memref<128x64xbf16, #tpu.memory_space<vmem>>, vector<128x64xbf16>
    %cst_22 = arith.constant dense<0.000000e+00> : vector<32x64xf32>
    %37 = tpu.matmul %35, %36, %cst_22 {dimension_numbers = #tpu.dot_dimension_numbers<[1], [0], [0], [1], [0, 0, 1, 1], [], []>} : vector<32x128xbf16>, vector<128x64xbf16>, vector<32x64xf32> -> vector<32x64xf32>
    %c0_23 = arith.constant 0 : index
    %c0_24 = arith.constant 0 : index
    %38 = vector.load %arg9[%c0_23, %c0_24] : memref<1x64xf32, #tpu.memory_space<vmem>>, vector<1x64xf32>
    %39 = vector.broadcast %38 : vector<1x64xf32> to vector<32x64xf32>
    %40 = arith.addf %37, %39 : vector<32x64xf32>
    %41 = arith.addf %4, %40 : vector<32x64xf32>
    %c0_25 = arith.constant 0 : index
    %c0_26 = arith.constant 0 : index
    %42 = vector.load %arg10[%c0_25, %c0_26] : memref<32x64xf32, #tpu.memory_space<vmem>>, vector<32x64xf32>
    tpu.vector_store %arg10[%c0_25, %c0_26], %41 {strides = array<i32>} : memref<32x64xf32, #tpu.memory_space<vmem>>, vector<32x64xf32>,
    return
  }
  func.func @transform_0(%arg0: i32) -> (i32, i32) {
    %c0_i32 = arith.constant 0 : i32
    %c0_i32_0 = arith.constant 0 : i32
    return %arg0, %c0_i32 : i32, i32
  }
  func.func @transform_1(%arg0: i32) -> (i32, i32) {
    %c0_i32 = arith.constant 0 : i32
    %c0_i32_0 = arith.constant 0 : i32
    return %arg0, %c0_i32 : i32, i32
  }
  func.func @transform_2(%arg0: i32) -> (i32, i32) {
    %c0_i32 = arith.constant 0 : i32
    %c0_i32_0 = arith.constant 0 : i32
    %c0_i32_1 = arith.constant 0 : i32
    return %c0_i32, %c0_i32_0 : i32, i32
  }
  func.func @transform_3(%arg0: i32) -> (i32, i32) {
    %c0_i32 = arith.constant 0 : i32
    %c0_i32_0 = arith.constant 0 : i32
    %c0_i32_1 = arith.constant 0 : i32
    return %c0_i32, %c0_i32_0 : i32, i32
  }
  func.func @transform_4(%arg0: i32) -> (i32, i32) {
    %c0_i32 = arith.constant 0 : i32
    %c0_i32_0 = arith.constant 0 : i32
    %c0_i32_1 = arith.constant 0 : i32
    return %c0_i32, %c0_i32_0 : i32, i32
  }
  func.func @transform_5(%arg0: i32) -> (i32, i32) {
    %c0_i32 = arith.constant 0 : i32
    %c0_i32_0 = arith.constant 0 : i32
    %c0_i32_1 = arith.constant 0 : i32
    return %c0_i32, %c0_i32_0 : i32, i32
  }
  func.func @transform_6(%arg0: i32) -> (i32, i32) {
    %c0_i32 = arith.constant 0 : i32
    %c0_i32_0 = arith.constant 0 : i32
    %c0_i32_1 = arith.constant 0 : i32
    return %c0_i32, %c0_i32_0 : i32, i32
  }
  func.func @transform_7(%arg0: i32) -> (i32, i32) {
    %c0_i32 = arith.constant 0 : i32
    %c0_i32_0 = arith.constant 0 : i32
    %c0_i32_1 = arith.constant 0 : i32
    return %c0_i32, %c0_i32_0 : i32, i32
  }
  func.func @transform_8(%arg0: i32) -> (i32, i32) {
    %c0_i32 = arith.constant 0 : i32
    %c0_i32_0 = arith.constant 0 : i32
    %c0_i32_1 = arith.constant 0 : i32
    return %c0_i32, %c0_i32_0 : i32, i32
  }
  func.func @transform_9(%arg0: i32) -> (i32, i32) {
    %c0_i32 = arith.constant 0 : i32
    %c0_i32_0 = arith.constant 0 : i32
    return %arg0, %c0_i32 : i32, i32
  }
}

</mosaic_0001>

<llo_original>
// kernel: encoder_layer.3
$region0: #{encoder_layer.3}
  #allocation0 [shape = 'u32[]', space=smem, size = 0x4, offset = 0x4, fixed_abs, tag = 'smem constant byte address 0x4 - core index']
  #allocation1 [shape = 'u32[72,128]{1,0:T(1,128)}', space=vmem, size = 0x9000, scoped, tag = 'internal scratch']
  %s0 = inlined_call_operand.vmem [shape: f32[32,64], index: 0, kind: input, shape index: {}]
  %s1 = inlined_call_operand.vmem [shape: f32[1,64], index: 1, kind: input, shape index: {}]
  %s2 = inlined_call_operand.vmem [shape: f32[1,64], index: 2, kind: input, shape index: {}]
  %s3 = inlined_call_operand.vmem [shape: bf16[64,192], index: 3, kind: input, shape index: {}]
  %s4 = inlined_call_operand.vmem [shape: bf16[32,192], index: 4, kind: output, shape index: {}]
  %s5 = sld [smem:[#allocation0]]
  $region26: #{encoder_layer.3} parent=0
    _
  %s7 = ssub.s32 1, %s5
  %s8 = scalar_select 0, %s7, %s5
  // Predicated region
  $region2: #{encoder_layer.3} parent=0 // pred_check
    _
  $region3: #{encoder_layer.3} parent=0 // pred_check_branch
    %10 = sbr.rel (0) target = $region5
  $region4: #{encoder_layer.3} parent=0 // pred_region
    _
  $region5: #{encoder_layer.3} parent=0 // pred_fallthru
    _
  // Predicated region
  $region6: #{encoder_layer.3} parent=0 // pred_check
    _
  $region7: #{encoder_layer.3} parent=0 // pred_check_branch
    %12 = sbr.rel (0) target = $region9
  $region8: #{encoder_layer.3} parent=0 // pred_region
    _
  $region9: #{encoder_layer.3} parent=0 // pred_fallthru
    _
  // Predicated region
  $region10: #{encoder_layer.3} parent=0 // pred_check
    _
  $region11: #{encoder_layer.3} parent=0 // pred_check_branch
    %14 = sbr.rel (0) target = $region13
  $region12: #{encoder_layer.3} parent=0 // pred_region
    _
  $region13: #{encoder_layer.3} parent=0 // pred_fallthru
    _
  // Predicated region
  $region14: #{encoder_layer.3} parent=0 // pred_check
    _
  $region15: #{encoder_layer.3} parent=0 // pred_check_branch
    %16 = sbr.rel (0) target = $region17
  $region16: #{encoder_layer.3} parent=0 // pred_region
    _
  $region17: #{encoder_layer.3} parent=0 // pred_fallthru
    _
  %v18 = vld [vmem:[%s0] sm:$0xff]
  %v19 = vld [vmem:[%s0 + $0x8] sm:$0xff]
  %v20 = vld [vmem:[%s0 + $0x10] sm:$0xff]
  %v21 = vld [vmem:[%s0 + $0x18] sm:$0xff]
  %v22 = vld [vmem:[%s1] sm:$0x1]
  %v23 = vld [vmem:[%s2] sm:$0x1]
  %vm24 = vcmask 523264
  %v25 = vsel %vm24, %v18, 0.0
  %26 = vadd.xlane.f32.xlu0 %v25
  %v27 = vpop.xlane.xlu0 %26
  %v28 = vsel %vm24, %v19, 0.0
  %29 = vadd.xlane.f32.xlu0 %v28
  %v30 = vpop.xlane.xlu0 %29
  %v31 = vsel %vm24, %v20, 0.0
  %32 = vadd.xlane.f32.xlu0 %v31
  %v33 = vpop.xlane.xlu0 %32
  %v34 = vsel %vm24, %v21, 0.0
  %35 = vadd.xlane.f32.xlu0 %v34
  %v36 = vpop.xlane.xlu0 %35
  %v37 = vrcp.pop 64.0
  %v38 = vmul.f32 64.0, %v37
  %v39 = vsub.f32 1.0, %v38
  %v40 = vmul.f32 %v37, %v39
  %v41 = vadd.f32 %v37, %v40
  %vm42 = vweird.f32 %v37
  %v43 = vsel %vm42, %v37, %v41
  %v44 = vmul.f32 %v27, %v43
  %v45 = vmul.f32 %v30, %v43
  %v46 = vmul.f32 %v33, %v43
  %v47 = vmul.f32 %v36, %v43
  %v48 = vsub.f32 %v18, %v44
  %v49 = vsub.f32 %v19, %v45
  %v50 = vsub.f32 %v20, %v46
  %v51 = vsub.f32 %v21, %v47
  %v52 = vmul.f32 %v48, %v48
  %v53 = vmul.f32 %v49, %v49
  %v54 = vmul.f32 %v50, %v50
  %v55 = vmul.f32 %v51, %v51
  %v56 = vsel %vm24, %v52, 0.0
  %57 = vadd.xlane.f32.xlu0 %v56
  %v58 = vpop.xlane.xlu0 %57
  %v59 = vsel %vm24, %v53, 0.0
  %60 = vadd.xlane.f32.xlu0 %v59
  %v61 = vpop.xlane.xlu0 %60
  %v62 = vsel %vm24, %v54, 0.0
  %63 = vadd.xlane.f32.xlu0 %v62
  %v64 = vpop.xlane.xlu0 %63
  %v65 = vsel %vm24, %v55, 0.0
  %66 = vadd.xlane.f32.xlu0 %v65
  %v67 = vpop.xlane.xlu0 %66
  %v68 = vmul.f32 %v58, %v43
  %v69 = vmul.f32 %v61, %v43
  %v70 = vmul.f32 %v64, %v43
  %v71 = vmul.f32 %v67, %v43
  %v72 = vadd.f32 %v68, 1e-06
  %v73 = vadd.f32 %v69, 1e-06
  %v74 = vadd.f32 %v70, 1e-06
  %v75 = vadd.f32 %v71, 1e-06
  %v76 = vrsqrt.pop %v72
  %v77 = vmul.f32 %v76, %v72
  %v78 = vmul.f32 %v77, %v76
  %v79 = vmul.f32 0.5, %v78
  %v80 = vsub.f32 1.5, %v79
  %v81 = vmul.f32 %v76, %v80
  %vm82 = vweird.f32 %v72
  %vm83 = vweird.f32 %v76
  %vm84 = vmor %vm82, %vm83
  %v85 = vsel %vm84, %v76, %v81
  %v86 = vrsqrt.pop %v73
  %v87 = vmul.f32 %v86, %v73
  %v88 = vmul.f32 %v87, %v86
  %v89 = vmul.f32 0.5, %v88
  %v90 = vsub.f32 1.5, %v89
  %v91 = vmul.f32 %v86, %v90
  %vm92 = vweird.f32 %v73
  %vm93 = vweird.f32 %v86
  %vm94 = vmor %vm92, %vm93
  %v95 = vsel %vm94, %v86, %v91
  %v96 = vrsqrt.pop %v74
  %v97 = vmul.f32 %v96, %v74
  %v98 = vmul.f32 %v97, %v96
  %v99 = vmul.f32 0.5, %v98
  %v100 = vsub.f32 1.5, %v99
  %v101 = vmul.f32 %v96, %v100
  %vm102 = vweird.f32 %v74
  %vm103 = vweird.f32 %v96
  %vm104 = vmor %vm102, %vm103
  %v105 = vsel %vm104, %v96, %v101
  %v106 = vrsqrt.pop %v75
  %v107 = vmul.f32 %v106, %v75
  %v108 = vmul.f32 %v107, %v106
  %v109 = vmul.f32 0.5, %v108
  %v110 = vsub.f32 1.5, %v109
  %v111 = vmul.f32 %v106, %v110
  %vm112 = vweird.f32 %v75
  %vm113 = vweird.f32 %v106
  %vm114 = vmor %vm112, %vm113
  %v115 = vsel %vm114, %v106, %v111
  %v116 = vmul.f32 %v48, %v85
  %v117 = vmul.f32 %v49, %v95
  %v118 = vmul.f32 %v50, %v105
  %v119 = vmul.f32 %v51, %v115
  %v121 = vperm.slane %v22, 0
  %v123 = vmul.f32 %v116, %v121
  %v124 = vmul.f32 %v117, %v121
  %v125 = vmul.f32 %v118, %v121
  %v126 = vmul.f32 %v119, %v121
  %v128 = vperm.slane %v23, 0
  %v130 = vadd.f32 %v123, %v128
  %v131 = vadd.f32 %v124, %v128
  %v132 = vadd.f32 %v125, %v128
  %v133 = vadd.f32 %v126, %v128
  %v134 = vpack.c.bf16 %v131, %v130
  %v135 = vpack.c.bf16 %v133, %v132
  %v136 = vld [vmem:[%s3] sm:$0xff]
  %v137 = vld [vmem:[%s3 + $0x8] sm:$0xff]
  %v138 = vld [vmem:[%s3 + $0x10] sm:$0xff]
  %v139 = vld [vmem:[%s3 + $0x18] sm:$0xff]
  %v140 = vld [vmem:[%s3 + $0x20] sm:$0xff]
  %v141 = vld [vmem:[%s3 + $0x28] sm:$0xff]
  %v142 = vld [vmem:[%s3 + $0x30] sm:$0xff]
  %v143 = vld [vmem:[%s3 + $0x38] sm:$0xff]
  %v152 = vunpack.c.l.b16 %v136
  %v153 = vunpack.c.h.b16 %v136
  %v154 = vunpack.c.l.b16 %v137
  %v155 = vunpack.c.h.b16 %v137
  %v156 = vunpack.c.l.b16 %v138
  %v157 = vunpack.c.h.b16 %v138
  %v158 = vunpack.c.l.b16 %v139
  %v159 = vunpack.c.h.b16 %v139
  %v160 = vunpack.c.l.b16 %v140
  %v161 = vunpack.c.h.b16 %v140
  %v162 = vunpack.c.l.b16 %v141
  %v163 = vunpack.c.h.b16 %v141
  %v164 = vunpack.c.l.b16 %v142
  %v165 = vunpack.c.h.b16 %v142
  %v166 = vunpack.c.l.b16 %v143
  %v167 = vunpack.c.h.b16 %v143
  %v168 = vpack.c.b16 %v154, %v152
  %v169 = vpack.c.b16 %v155, %v153
  %v170 = vpack.c.b16 %v158, %v156
  %v171 = vpack.c.b16 %v159, %v157
  %v172 = vpack.c.b16 %v162, %v160
  %v173 = vpack.c.b16 %v163, %v161
  %v174 = vpack.c.b16 %v166, %v164
  %v175 = vpack.c.b16 %v167, %v165
  %v185 = vsel %vm24, %v134, 0
  %v188 = vsel %vm24, %v135, 0
  %190 = vmatpush.bf16.msra.mxu0 0
  %191 = vmatpush.bf16.msra.mxu0 0
  %192 = vmatpush.bf16.msra.mxu0 0
  %193 = vmatpush.bf16.msra.mxu0 0
  %194 = vmatpush.bf16.msra.mxu0 %v174
  %195 = vmatpush.bf16.msra.mxu0 %v172
  %196 = vmatpush.bf16.msra.mxu0 %v170
  %197 = vmatpush.bf16.msra.mxu0 %v168
  %198 = vmatmul.bf16.gmra.mxu0 %v185
  %v199 = vpop.f32.mrf.mxu0
  %v200 = vadd.f32 0.0, %v199
  %v201 = vpop.f32.mrf.mxu0
  %v202 = vadd.f32 0.0, %v201
  %203 = vmatmul.bf16.gmra.mxu0 %v188
  %v204 = vpop.f32.mrf.mxu0
  %v205 = vadd.f32 0.0, %v204
  %v206 = vpop.f32.mrf.mxu0
  %v207 = vadd.f32 0.0, %v206
  %208 = vdwg.mxu0
  %209 = vmatpush.bf16.msra.mxu0 0
  %210 = vmatpush.bf16.msra.mxu0 0
  %211 = vmatpush.bf16.msra.mxu0 0
  %212 = vmatpush.bf16.msra.mxu0 0
  %213 = vmatpush.bf16.msra.mxu0 %v175
  %214 = vmatpush.bf16.msra.mxu0 %v173
  %215 = vmatpush.bf16.msra.mxu0 %v171
  %216 = vmatpush.bf16.msra.mxu0 %v169
  %217 = vmatmul.bf16.gmra.mxu0 %v185
  %v218 = vpop.f32.mrf.mxu0
  %v219 = vadd.f32 0.0, %v218
  %v220 = vpop.f32.mrf.mxu0
  %v221 = vadd.f32 0.0, %v220
  %222 = vmatmul.bf16.gmra.mxu0 %v188
  %v223 = vpop.f32.mrf.mxu0
  %v224 = vadd.f32 0.0, %v223
  %v225 = vpop.f32.mrf.mxu0
  %v226 = vadd.f32 0.0, %v225
  %227 = vdwg.mxu0
  %v228 = vpack.c.bf16 %v219, %v200
  %v229 = vpack.c.bf16 %v221, %v202
  %v230 = vpack.c.bf16 %v224, %v205
  %v231 = vpack.c.bf16 %v226, %v207
  %vm232 = vcmask 1043456
  %vm233 = vcmask 523268
  %vm234 = vmor %vm233, %vm232
  %235 = vst.msk [vmem:[%s4] sm:$0xff] %vm234, %v228
  %236 = vst.msk [vmem:[%s4 + $0x8] sm:$0xff] %vm234, %v229
  %237 = vst.msk [vmem:[%s4 + $0x10] sm:$0xff] %vm234, %v230
  %238 = vst.msk [vmem:[%s4 + $0x18] sm:$0xff] %vm234, %v231
  // Predicated region
  $region18: #{encoder_layer.3} parent=0 // pred_check
    _
  $region19: #{encoder_layer.3} parent=0 // pred_check_branch
    %240 = sbr.rel (0) target = $region21
  $region20: #{encoder_layer.3} parent=0 // pred_region
    _
  $region21: #{encoder_layer.3} parent=0 // pred_fallthru
    _
  // Predicated region
  $region22: #{encoder_layer.3} parent=0 // pred_check
    _
  $region23: #{encoder_layer.3} parent=0 // pred_check_branch
    %242 = sbr.rel (0) target = $region25
  $region24: #{encoder_layer.3} parent=0 // pred_region
    _
  $region25: #{encoder_layer.3} parent=0 // pred_fallthru
    _

// kernel: encoder_layer.4
$region0: #{encoder_layer.4}
  #allocation0 [shape = 'u32[]', space=smem, size = 0x4, offset = 0x4, fixed_abs, tag = 'smem constant byte address 0x4 - core index']
  #allocation1 [shape = 'u32[72,128]{1,0:T(1,128)}', space=vmem, size = 0x9000, scoped, tag = 'internal scratch']
  %s0 = inlined_call_operand.vmem [shape: bf16[2,8,16,8], index: 0, kind: input, shape index: {}]
  %s1 = inlined_call_operand.vmem [shape: bf16[2,8,16,8], index: 1, kind: input, shape index: {}]
  %s2 = inlined_call_operand.vmem [shape: bf16[2,8,16,8], index: 2, kind: input, shape index: {}]
  %s3 = inlined_call_operand.vmem [shape: bf16[2,16,16], index: 3, kind: input, shape index: {}]
  %s4 = inlined_call_operand.vmem [shape: bf16[2,8,16,8], index: 4, kind: output, shape index: {}]
  %s5 = sld [smem:[#allocation0]]
  $region49: #{encoder_layer.4} parent=0
    _
  %s7 = ssub.s32 1, %s5
  %s8 = scalar_select 0, %s7, %s5
  loop: start=0, step=1, limit=4
  $region2: #{encoder_layer.4} parent=0 // loop_pre_header
    _
  $region3: #{encoder_layer.4} parent=0 // loop_header
    %s10 = sphi 0, %s14
    %p11 = scmp.ge.s32.totalorder %s10, 4
    %s20 = sphi 0, %s22
    %s23 = sphi 0, %s20
    %s24 = sphi 0, %s23
    %s40 = sphi 0, %s24
    %s46 = sphi 0, %s48
    %s49 = sphi 0, %s46
    %s50 = sphi 0, %s49
    %s66 = sphi 0, %s50
    %s72 = sphi 0, %s74
    %s75 = sphi 0, %s72
    %s76 = sphi 0, %s75
    %s92 = sphi 0, %s76
    %s98 = sphi 0, %s100
    %s101 = sphi 0, %s98
    %s102 = sphi 0, %s101
    %s118 = sphi 0, %s102
    %s124 = sphi 0, %s126
    %s127 = sphi 0, %s124
    %s128 = sphi 0, %s127
    %s144 = sphi 0, %s128
  $region4: #{encoder_layer.4} parent=0 // loop_header_branch
    %13 = sbr.rel (%p11) target = $region8
  $region5: #{encoder_layer.4} parent=0 // loop_body
    %s15 = ssub.s32 %s10, 1
    %s16 = ssub.s32 %s10, 2
    %s17 = sadd.s32 %s10, 1
    %s18 = ssub.s32 %s10, %s17
    %p19 = scmp.eq.s32.totalorder %s18, 0
    %s21 = sadd.s32 %s20, 1
    %s22 = scalar_select %p19, %s20, %s21
    %p25 = pneg %p19
    %p26 = scmp.eq.s32.totalorder %s10, 1
    %p27 = por %p25, %p26
    %p28 = scmp.ne.s32.totalorder %s20, %s23
    %p29 = scmp.eq.s32.totalorder %s10, 0
    %p30 = por %p28, %p29
    %p31 = scmp.ne.s32.totalorder %s20, %s23
    %p32 = scmp.eq.s32.totalorder %s15, 1
    %p33 = por %p31, %p32
    %p34 = scmp.ne.s32.totalorder %s23, %s24
    %p35 = scmp.eq.s32.totalorder %s15, 0
    %p36 = por %p34, %p35
    %p37 = scmp.ne.s32.totalorder %s23, %s24
    %p38 = scmp.eq.s32.totalorder %s16, 1
    %p39 = por %p37, %p38
    %p41 = scmp.ne.s32.totalorder %s24, %s40
    %p42 = scmp.eq.s32.totalorder %s16, 0
    %p43 = por %p41, %p42
    %s44 = ssub.s32 %s10, %s17
    %p45 = scmp.eq.s32.totalorder %s44, 0
    %s47 = sadd.s32 %s46, 1
    %s48 = scalar_select %p45, %s46, %s47
    %p51 = pneg %p45
    %p52 = scmp.eq.s32.totalorder %s10, 1
    %p53 = por %p51, %p52
    %p54 = scmp.ne.s32.totalorder %s46, %s49
    %p55 = scmp.eq.s32.totalorder %s10, 0
    %p56 = por %p54, %p55
    %p57 = scmp.ne.s32.totalorder %s46, %s49
    %p58 = scmp.eq.s32.totalorder %s15, 1
    %p59 = por %p57, %p58
    %p60 = scmp.ne.s32.totalorder %s49, %s50
    %p61 = scmp.eq.s32.totalorder %s15, 0
    %p62 = por %p60, %p61
    %p63 = scmp.ne.s32.totalorder %s49, %s50
    %p64 = scmp.eq.s32.totalorder %s16, 1
    %p65 = por %p63, %p64
    %p67 = scmp.ne.s32.totalorder %s50, %s66
    %p68 = scmp.eq.s32.totalorder %s16, 0
    %p69 = por %p67, %p68
    %s70 = ssub.s32 %s10, %s17
    %p71 = scmp.eq.s32.totalorder %s70, 0
    %s73 = sadd.s32 %s72, 1
    %s74 = scalar_select %p71, %s72, %s73
    %p77 = pneg %p71
    %p78 = scmp.eq.s32.totalorder %s10, 1
    %p79 = por %p77, %p78
    %p80 = scmp.ne.s32.totalorder %s72, %s75
    %p81 = scmp.eq.s32.totalorder %s10, 0
    %p82 = por %p80, %p81
    %p83 = scmp.ne.s32.totalorder %s72, %s75
    %p84 = scmp.eq.s32.totalorder %s15, 1
    %p85 = por %p83, %p84
    %p86 = scmp.ne.s32.totalorder %s75, %s76
    %p87 = scmp.eq.s32.totalorder %s15, 0
    %p88 = por %p86, %p87
    %p89 = scmp.ne.s32.totalorder %s75, %s76
    %p90 = scmp.eq.s32.totalorder %s16, 1
    %p91 = por %p89, %p90
    %p93 = scmp.ne.s32.totalorder %s76, %s92
    %p94 = scmp.eq.s32.totalorder %s16, 0
    %p95 = por %p93, %p94
    %s96 = ssub.s32 %s10, %s17
    %p97 = scmp.eq.s32.totalorder %s96, 0
    %s99 = sadd.s32 %s98, 1
    %s100 = scalar_select %p97, %s98, %s99
    %p103 = pneg %p97
    %p104 = scmp.eq.s32.totalorder %s10, 1
    %p105 = por %p103, %p104
    %p106 = scmp.ne.s32.totalorder %s98, %s101
    %p107 = scmp.eq.s32.totalorder %s10, 0
    %p108 = por %p106, %p107
    %p109 = scmp.ne.s32.totalorder %s98, %s101
    %p110 = scmp.eq.s32.totalorder %s15, 1
    %p111 = por %p109, %p110
    %p112 = scmp.ne.s32.totalorder %s101, %s102
    %p113 = scmp.eq.s32.totalorder %s15, 0
    %p114 = por %p112, %p113
    %p115 = scmp.ne.s32.totalorder %s101, %s102
    %p116 = scmp.eq.s32.totalorder %s16, 1
    %p117 = por %p115, %p116
    %p119 = scmp.ne.s32.totalorder %s102, %s118
    %p120 = scmp.eq.s32.totalorder %s16, 0
    %p121 = por %p119, %p120
    %s122 = ssub.s32 %s10, %s17
    %p123 = scmp.eq.s32.totalorder %s122, 0
    %s125 = sadd.s32 %s124, 1
    %s126 = scalar_select %p123, %s124, %s125
    %p129 = pneg %p123
    %p130 = scmp.eq.s32.totalorder %s10, 1
    %p131 = por %p129, %p130
    %p132 = scmp.ne.s32.totalorder %s124, %s127
    %p133 = scmp.eq.s32.totalorder %s10, 0
    %p134 = por %p132, %p133
    %p135 = scmp.ne.s32.totalorder %s124, %s127
    %p136 = scmp.eq.s32.totalorder %s15, 1
    %p137 = por %p135, %p136
    %p138 = scmp.ne.s32.totalorder %s127, %s128
    %p139 = scmp.eq.s32.totalorder %s15, 0
    %p140 = por %p138, %p139
    %p141 = scmp.ne.s32.totalorder %s127, %s128
    %p142 = scmp.eq.s32.totalorder %s16, 1
    %p143 = por %p141, %p142
    %p145 = scmp.ne.s32.totalorder %s128, %s144
    %p146 = scmp.eq.s32.totalorder %s16, 0
    %p147 = por %p145, %p146
    %p148 = scmp.le.s32.totalorder 1, %s10
    %p149 = scmp.lt.s32.totalorder %s10, 3
    %p150 = pnand %p148, %p149
    %p151 = pneg %p150
    // Predicated region
    $region9: #{encoder_layer.4} parent=5 // pred_check
      _
    $region10: #{encoder_layer.4} parent=5 // pred_check_branch
      %153 = sbr.rel (%p150) target = $region12
    $region11: #{encoder_layer.4} parent=5 // pred_region
      %s154 = ssub.s32 %s10, 1
    $region12: #{encoder_layer.4} parent=5 // pred_fallthru
      _
    %p155 = scmp.lt.s32.totalorder %s10, 2
    // Predicated region
    $region13: #{encoder_layer.4} parent=5 // pred_check
      %p156 = pneg %p155
    $region14: #{encoder_layer.4} parent=5 // pred_check_branch
      %158 = sbr.rel (%p156) target = $region16
    $region15: #{encoder_layer.4} parent=5 // pred_region
      // Predicated region
      $region17: #{encoder_layer.4} parent=15 // pred_check
        %p159 = pneg %p30
      $region18: #{encoder_layer.4} parent=15 // pred_check_branch
        %161 = sbr.rel (%p159) target = $region20
      $region19: #{encoder_layer.4} parent=15 // pred_region
        %p162 = scmp.lt.s32.totalorder %s10, 1
        %s163 = scalar_select %p162, %s10, 1
        %s164 = smul.addr %s163, 16
        %s165 = smul.addr %s164, 4
        %s166 = scalar_lea.vmem %s0, %s165
      $region20: #{encoder_layer.4} parent=15 // pred_fallthru
        _
      // Predicated region
      $region21: #{encoder_layer.4} parent=15 // pred_check
        %p167 = pneg %p56
      $region22: #{encoder_layer.4} parent=15 // pred_check_branch
        %169 = sbr.rel (%p167) target = $region24
      $region23: #{encoder_layer.4} parent=15 // pred_region
        %p170 = scmp.lt.s32.totalorder %s10, 1
        %s171 = scalar_select %p170, %s10, 1
        %s172 = smul.addr %s171, 16
        %s173 = smul.addr %s172, 4
        %s174 = scalar_lea.vmem %s1, %s173
      $region24: #{encoder_layer.4} parent=15 // pred_fallthru
        _
      // Predicated region
      $region25: #{encoder_layer.4} parent=15 // pred_check
        %p175 = pneg %p82
      $region26: #{encoder_layer.4} parent=15 // pred_check_branch
        %177 = sbr.rel (%p175) target = $region28
      $region27: #{encoder_layer.4} parent=15 // pred_region
        %p178 = scmp.lt.s32.totalorder %s10, 1
        %s179 = scalar_select %p178, %s10, 1
        %s180 = smul.addr %s179, 16
        %s181 = smul.addr %s180, 4
        %s182 = scalar_lea.vmem %s2, %s181
      $region28: #{encoder_layer.4} parent=15 // pred_fallthru
        _
      // Predicated region
      $region29: #{encoder_layer.4} parent=15 // pred_check
        %p183 = pneg %p108
      $region30: #{encoder_layer.4} parent=15 // pred_check_branch
        %185 = sbr.rel (%p183) target = $region32
      $region31: #{encoder_layer.4} parent=15 // pred_region
        %p186 = scmp.lt.s32.totalorder %s10, 1
        %s187 = scalar_select %p186, %s10, 1
        %s188 = smul.addr %s187, 2
        %s189 = smul.addr %s188, 4
        %s190 = scalar_lea.vmem %s3, %s189
      $region32: #{encoder_layer.4} parent=15 // pred_fallthru
        _
    $region16: #{encoder_layer.4} parent=5 // pred_fallthru
      _
    %p191 = scmp.le.s32.totalorder 1, %s10
    %p192 = scmp.lt.s32.totalorder %s10, 3
    %p193 = pnand %p191, %p192
    %p194 = pneg %p193
    // Predicated region
    $region33: #{encoder_layer.4} parent=5 // pred_check
      _
    $region34: #{encoder_layer.4} parent=5 // pred_check_branch
      %196 = sbr.rel (%p193) target = $region36
    $region35: #{encoder_layer.4} parent=5 // pred_region
      %s197 = ssub.s32 %s10, 1
      %p198 = scmp.lt.s32.totalorder %s15, 1
      %s199 = scalar_select %p198, %s15, 1
      %s200 = smul.addr %s199, 16
      %s201 = smul.addr %s200, 4
      %s202 = scalar_lea.vmem %s0, %s201
      %p203 = pneg %p36
      %p204 = pneg %p33
      %p205 = scmp.lt.s32.totalorder %s15, 1
      %s206 = scalar_select %p205, %s15, 1
      %s207 = smul.addr %s206, 16
      %s208 = smul.addr %s207, 4
      %s209 = scalar_lea.vmem %s1, %s208
      %p210 = pneg %p62
      %p211 = pneg %p59
      %p212 = scmp.lt.s32.totalorder %s15, 1
      %s213 = scalar_select %p212, %s15, 1
      %s214 = smul.addr %s213, 16
      %s215 = smul.addr %s214, 4
      %s216 = scalar_lea.vmem %s2, %s215
      %p217 = pneg %p88
      %p218 = pneg %p85
      %p219 = scmp.lt.s32.totalorder %s15, 1
      %s220 = scalar_select %p219, %s15, 1
      %s221 = smul.addr %s220, 2
      %s222 = smul.addr %s221, 4
      %s223 = scalar_lea.vmem %s3, %s222
      %p224 = pneg %p114
      %p225 = pneg %p111
      %p226 = pneg %p140
      %p227 = pneg %p137
      %p228 = scmp.lt.s32.totalorder %s15, 1
      %s229 = scalar_select %p228, %s15, 1
      %s230 = smul.addr %s229, 16
      %s231 = smul.addr %s230, 4
      %s232 = scalar_lea.vmem %s4, %s231
      %p233 = scmp.lt.s32.totalorder %s15, 1
      %s234 = scalar_select %p233, %s15, 1
      %s235 = smul.addr %s234, 16
      %s236 = smul.addr %s235, 4
      %s237 = scalar_lea.vmem %s0, %s236
      %p238 = scmp.lt.s32.totalorder %s15, 1
      %s239 = scalar_select %p238, %s15, 1
      %s240 = smul.addr %s239, 16
      %s241 = smul.addr %s240, 4
      %s242 = scalar_lea.vmem %s1, %s241
      %p243 = scmp.lt.s32.totalorder %s15, 1
      %s244 = scalar_select %p243, %s15, 1
      %s245 = smul.addr %s244, 16
      %s246 = smul.addr %s245, 4
      %s247 = scalar_lea.vmem %s2, %s246
      %p248 = scmp.lt.s32.totalorder %s15, 1
      %s249 = scalar_select %p248, %s15, 1
      %s250 = smul.addr %s249, 2
      %s251 = smul.addr %s250, 4
      %s252 = scalar_lea.vmem %s3, %s251
      %p253 = scmp.lt.s32.totalorder %s15, 1
      %s254 = scalar_select %p253, %s15, 1
      %s255 = smul.addr %s254, 16
      %s256 = smul.addr %s255, 4
      %s257 = scalar_lea.vmem %s4, %s256
      %v259 = vld [vmem:[%s237] sm:$0xf]
      %v260 = vld [vmem:[%s237 + $0x4] sm:$0xf]
      %v261 = vld [vmem:[%s237 + $0x8] sm:$0xf]
      %v262 = vld [vmem:[%s237 + $0xc] sm:$0xf]
      %v263 = vld [vmem:[%s237 + $0x10] sm:$0xf]
      %v264 = vld [vmem:[%s237 + $0x14] sm:$0xf]
      %v265 = vld [vmem:[%s237 + $0x18] sm:$0xf]
      %v266 = vld [vmem:[%s237 + $0x1c] sm:$0xf]
      %v267 = vld [vmem:[%s237 + $0x20] sm:$0xf]
      %v268 = vld [vmem:[%s237 + $0x24] sm:$0xf]
      %v269 = vld [vmem:[%s237 + $0x28] sm:$0xf]
      %v270 = vld [vmem:[%s237 + $0x2c] sm:$0xf]
      %v271 = vld [vmem:[%s237 + $0x30] sm:$0xf]
      %v272 = vld [vmem:[%s237 + $0x34] sm:$0xf]
      %v273 = vld [vmem:[%s237 + $0x38] sm:$0xf]
      %v274 = vld [vmem:[%s237 + $0x3c] sm:$0xf]
      %v275 = vld [vmem:[%s242] sm:$0xf]
      %v276 = vld [vmem:[%s242 + $0x4] sm:$0xf]
      %v277 = vld [vmem:[%s242 + $0x8] sm:$0xf]
      %v278 = vld [vmem:[%s242 + $0xc] sm:$0xf]
      %v279 = vld [vmem:[%s242 + $0x10] sm:$0xf]
      %v280 = vld [vmem:[%s242 + $0x14] sm:$0xf]
      %v281 = vld [vmem:[%s242 + $0x18] sm:$0xf]
      %v282 = vld [vmem:[%s242 + $0x1c] sm:$0xf]
      %v283 = vld [vmem:[%s242 + $0x20] sm:$0xf]
      %v284 = vld [vmem:[%s242 + $0x24] sm:$0xf]
      %v285 = vld [vmem:[%s242 + $0x28] sm:$0xf]
      %v286 = vld [vmem:[%s242 + $0x2c] sm:$0xf]
      %v287 = vld [vmem:[%s242 + $0x30] sm:$0xf]
      %v288 = vld [vmem:[%s242 + $0x34] sm:$0xf]
      %v289 = vld [vmem:[%s242 + $0x38] sm:$0xf]
      %v290 = vld [vmem:[%s242 + $0x3c] sm:$0xf]
      %v291 = vld [vmem:[%s247] sm:$0xf]
      %v292 = vld [vmem:[%s247 + $0x4] sm:$0xf]
      %v293 = vld [vmem:[%s247 + $0x8] sm:$0xf]
      %v294 = vld [vmem:[%s247 + $0xc] sm:$0xf]
      %v295 = vld [vmem:[%s247 + $0x10] sm:$0xf]
      %v296 = vld [vmem:[%s247 + $0x14] sm:$0xf]
      %v297 = vld [vmem:[%s247 + $0x18] sm:$0xf]
      %v298 = vld [vmem:[%s247 + $0x1c] sm:$0xf]
      %v299 = vld [vmem:[%s247 + $0x20] sm:$0xf]
      %v300 = vld [vmem:[%s247 + $0x24] sm:$0xf]
      %v301 = vld [vmem:[%s247 + $0x28] sm:$0xf]
      %v302 = vld [vmem:[%s247 + $0x2c] sm:$0xf]
      %v303 = vld [vmem:[%s247 + $0x30] sm:$0xf]
      %v304 = vld [vmem:[%s247 + $0x34] sm:$0xf]
      %v305 = vld [vmem:[%s247 + $0x38] sm:$0xf]
      %v306 = vld [vmem:[%s247 + $0x3c] sm:$0xf]
      %v309 = vunpack.c.l.b16 %v259
      %v310 = vunpack.c.l.b16 %v260
      %v311 = vpack.c.b16 %v310, %v309
      %v314 = vunpack.c.l.b16 %v275
      %v315 = vunpack.c.l.b16 %v276
      %v316 = vpack.c.b16 %v315, %v314
      %vm317 = vcmask 64512
      %v319 = vsel %vm317, %v311, 0
      %v322 = vsel %vm317, %v316, 0
      %324 = vmatpush.bf16.xpose.msra.mxu0 0
      %325 = vmatpush.bf16.xpose.msra.mxu0 0
      %326 = vmatpush.bf16.xpose.msra.mxu0 0
      %327 = vmatpush.bf16.xpose.msra.mxu0 0
      %328 = vmatpush.bf16.xpose.msra.mxu0 0
      %329 = vmatpush.bf16.xpose.msra.mxu0 0
      %330 = vmatpush.bf16.xpose.msra.mxu0 0
      %331 = vmatpush.bf16.xpose.msra.mxu0 %v322
      %332 = vmatmul.bf16.gmra.mxu0 %v319
      %v333 = vpop.f32.mrf.mxu0
      %v334 = vadd.f32 0.0, %v333
      %v335 = vpop.f32.mrf.mxu0
      %v336 = vadd.f32 0.0, %v335
      %337 = vdwg.mxu0
      %v340 = vunpack.c.l.b16 %v261
      %v341 = vunpack.c.l.b16 %v262
      %v342 = vpack.c.b16 %v341, %v340
      %v345 = vunpack.c.l.b16 %v277
      %v346 = vunpack.c.l.b16 %v278
      %v347 = vpack.c.b16 %v346, %v345
      %v349 = vsel %vm317, %v342, 0
      %v352 = vsel %vm317, %v347, 0
      %354 = vmatpush.bf16.xpose.msra.mxu0 0
      %355 = vmatpush.bf16.xpose.msra.mxu0 0
      %356 = vmatpush.bf16.xpose.msra.mxu0 0
      %357 = vmatpush.bf16.xpose.msra.mxu0 0
      %358 = vmatpush.bf16.xpose.msra.mxu0 0
      %359 = vmatpush.bf16.xpose.msra.mxu0 0
      %360 = vmatpush.bf16.xpose.msra.mxu0 0
      %361 = vmatpush.bf16.xpose.msra.mxu0 %v352
      %362 = vmatmul.bf16.gmra.mxu0 %v349
      %v363 = vpop.f32.mrf.mxu0
      %v364 = vadd.f32 0.0, %v363
      %v365 = vpop.f32.mrf.mxu0
      %v366 = vadd.f32 0.0, %v365
      %367 = vdwg.mxu0
      %v370 = vunpack.c.l.b16 %v263
      %v371 = vunpack.c.l.b16 %v264
      %v372 = vpack.c.b16 %v371, %v370
      %v375 = vunpack.c.l.b16 %v279
      %v376 = vunpack.c.l.b16 %v280
      %v377 = vpack.c.b16 %v376, %v375
      %v379 = vsel %vm317, %v372, 0
      %v382 = vsel %vm317, %v377, 0
      %384 = vmatpush.bf16.xpose.msra.mxu0 0
      %385 = vmatpush.bf16.xpose.msra.mxu0 0
      %386 = vmatpush.bf16.xpose.msra.mxu0 0
      %387 = vmatpush.bf16.xpose.msra.mxu0 0
      %388 = vmatpush.bf16.xpose.msra.mxu0 0
      %389 = vmatpush.bf16.xpose.msra.mxu0 0
      %390 = vmatpush.bf16.xpose.msra.mxu0 0
      %391 = vmatpush.bf16.xpose.msra.mxu0 %v382
      %392 = vmatmul.bf16.gmra.mxu0 %v379
      %v393 = vpop.f32.mrf.mxu0
      %v394 = vadd.f32 0.0, %v393
      %v395 = vpop.f32.mrf.mxu0
      %v396 = vadd.f32 0.0, %v395
      %397 = vdwg.mxu0
      %v400 = vunpack.c.l.b16 %v265
      %v401 = vunpack.c.l.b16 %v266
      %v402 = vpack.c.b16 %v401, %v400
      %v405 = vunpack.c.l.b16 %v281
      %v406 = vunpack.c.l.b16 %v282
      %v407 = vpack.c.b16 %v406, %v405
      %v409 = vsel %vm317, %v402, 0
      %v412 = vsel %vm317, %v407, 0
      %414 = vmatpush.bf16.xpose.msra.mxu0 0
      %415 = vmatpush.bf16.xpose.msra.mxu0 0
      %416 = vmatpush.bf16.xpose.msra.mxu0 0
      %417 = vmatpush.bf16.xpose.msra.mxu0 0
      %418 = vmatpush.bf16.xpose.msra.mxu0 0
      %419 = vmatpush.bf16.xpose.msra.mxu0 0
      %420 = vmatpush.bf16.xpose.msra.mxu0 0
      %421 = vmatpush.bf16.xpose.msra.mxu0 %v412
      %422 = vmatmul.bf16.gmra.mxu0 %v409
      %v423 = vpop.f32.mrf.mxu0
      %v424 = vadd.f32 0.0, %v423
      %v425 = vpop.f32.mrf.mxu0
      %v426 = vadd.f32 0.0, %v425
      %427 = vdwg.mxu0
      %v430 = vunpack.c.l.b16 %v267
      %v431 = vunpack.c.l.b16 %v268
      %v432 = vpack.c.b16 %v431, %v430
      %v435 = vunpack.c.l.b16 %v283
      %v436 = vunpack.c.l.b16 %v284
      %v437 = vpack.c.b16 %v436, %v435
      %v439 = vsel %vm317, %v432, 0
      %v442 = vsel %vm317, %v437, 0
      %444 = vmatpush.bf16.xpose.msra.mxu0 0
      %445 = vmatpush.bf16.xpose.msra.mxu0 0
      %446 = vmatpush.bf16.xpose.msra.mxu0 0
      %447 = vmatpush.bf16.xpose.msra.mxu0 0
      %448 = vmatpush.bf16.xpose.msra.mxu0 0
      %449 = vmatpush.bf16.xpose.msra.mxu0 0
      %450 = vmatpush.bf16.xpose.msra.mxu0 0
      %451 = vmatpush.bf16.xpose.msra.mxu0 %v442
      %452 = vmatmul.bf16.gmra.mxu0 %v439
      %v453 = vpop.f32.mrf.mxu0
      %v454 = vadd.f32 0.0, %v453
      %v455 = vpop.f32.mrf.mxu0
      %v456 = vadd.f32 0.0, %v455
      %457 = vdwg.mxu0
      %v460 = vunpack.c.l.b16 %v269
      %v461 = vunpack.c.l.b16 %v270
      %v462 = vpack.c.b16 %v461, %v460
      %v465 = vunpack.c.l.b16 %v285
      %v466 = vunpack.c.l.b16 %v286
      %v467 = vpack.c.b16 %v466, %v465
      %v469 = vsel %vm317, %v462, 0
      %v472 = vsel %vm317, %v467, 0
      %474 = vmatpush.bf16.xpose.msra.mxu0 0
      %475 = vmatpush.bf16.xpose.msra.mxu0 0
      %476 = vmatpush.bf16.xpose.msra.mxu0 0
      %477 = vmatpush.bf16.xpose.msra.mxu0 0
      %478 = vmatpush.bf16.xpose.msra.mxu0 0
      %479 = vmatpush.bf16.xpose.msra.mxu0 0
      %480 = vmatpush.bf16.xpose.msra.mxu0 0
      %481 = vmatpush.bf16.xpose.msra.mxu0 %v472
      %482 = vmatmul.bf16.gmra.mxu0 %v469
      %v483 = vpop.f32.mrf.mxu0
      %v484 = vadd.f32 0.0, %v483
      %v485 = vpop.f32.mrf.mxu0
      %v486 = vadd.f32 0.0, %v485
      %487 = vdwg.mxu0
      %v490 = vunpack.c.l.b16 %v271
      %v491 = vunpack.c.l.b16 %v272
      %v492 = vpack.c.b16 %v491, %v490
      %v495 = vunpack.c.l.b16 %v287
      %v496 = vunpack.c.l.b16 %v288
      %v497 = vpack.c.b16 %v496, %v495
      %v499 = vsel %vm317, %v492, 0
      %v502 = vsel %vm317, %v497, 0
      %504 = vmatpush.bf16.xpose.msra.mxu0 0
      %505 = vmatpush.bf16.xpose.msra.mxu0 0
      %506 = vmatpush.bf16.xpose.msra.mxu0 0
      %507 = vmatpush.bf16.xpose.msra.mxu0 0
      %508 = vmatpush.bf16.xpose.msra.mxu0 0
      %509 = vmatpush.bf16.xpose.msra.mxu0 0
      %510 = vmatpush.bf16.xpose.msra.mxu0 0
      %511 = vmatpush.bf16.xpose.msra.mxu0 %v502
      %512 = vmatmul.bf16.gmra.mxu0 %v499
      %v513 = vpop.f32.mrf.mxu0
      %v514 = vadd.f32 0.0, %v513
      %v515 = vpop.f32.mrf.mxu0
      %v516 = vadd.f32 0.0, %v515
      %517 = vdwg.mxu0
      %v520 = vunpack.c.l.b16 %v273
      %v521 = vunpack.c.l.b16 %v274
      %v522 = vpack.c.b16 %v521, %v520
      %v525 = vunpack.c.l.b16 %v289
      %v526 = vunpack.c.l.b16 %v290
      %v527 = vpack.c.b16 %v526, %v525
      %v529 = vsel %vm317, %v522, 0
      %v532 = vsel %vm317, %v527, 0
      %534 = vmatpush.bf16.xpose.msra.mxu0 0
      %535 = vmatpush.bf16.xpose.msra.mxu0 0
      %536 = vmatpush.bf16.xpose.msra.mxu0 0
      %537 = vmatpush.bf16.xpose.msra.mxu0 0
      %538 = vmatpush.bf16.xpose.msra.mxu0 0
      %539 = vmatpush.bf16.xpose.msra.mxu0 0
      %540 = vmatpush.bf16.xpose.msra.mxu0 0
      %541 = vmatpush.bf16.xpose.msra.mxu0 %v532
      %542 = vmatmul.bf16.gmra.mxu0 %v529
      %v543 = vpop.f32.mrf.mxu0
      %v544 = vadd.f32 0.0, %v543
      %v545 = vpop.f32.mrf.mxu0
      %v546 = vadd.f32 0.0, %v545
      %547 = vdwg.mxu0
      %v548 = vld [vmem:[%s252] sm:$0xf]
      %v549 = vld [vmem:[%s252 + $0x4] sm:$0xf]
      %v550 = vunpack.c.l.bf16 %v548
      %v551 = vunpack.c.l.bf16 %v549
      %vm552 = vcmp.ne.f32.partialorder %v550, 0.0
      %vm553 = vcmp.ne.f32.partialorder %v551, 0.0
      %v554 = vsel %vm552, 1, 0
      %v555 = vsel %vm553, 1, 0
      %vm556 = vcmp.eq.s32.totalorder %v554, 1
      %vm557 = vcmp.eq.s32.totalorder %v555, 1
      %v558 = vsel %vm556, -1e+09, %v334
      %v559 = vsel %vm557, -1e+09, %v336
      %v560 = vsel %vm556, -1e+09, %v364
      %v561 = vsel %vm557, -1e+09, %v366
      %v562 = vsel %vm556, -1e+09, %v394
      %v563 = vsel %vm557, -1e+09, %v396
      %v564 = vsel %vm556, -1e+09, %v424
      %v565 = vsel %vm557, -1e+09, %v426
      %v566 = vsel %vm556, -1e+09, %v454
      %v567 = vsel %vm557, -1e+09, %v456
      %v568 = vsel %vm556, -1e+09, %v484
      %v569 = vsel %vm557, -1e+09, %v486
      %v570 = vsel %vm556, -1e+09, %v514
      %v571 = vsel %vm557, -1e+09, %v516
      %v572 = vsel %vm556, -1e+09, %v544
      %v573 = vsel %vm557, -1e+09, %v546
      %vm574 = vcmask 130048
      %v575 = vsel %vm574, %v558, -inf
      %576 = vmax.xlane.f32.xlu0 %v575
      %v577 = vpop.xlane.xlu0 %576
      %v578 = vsel %vm574, %v559, -inf
      %579 = vmax.xlane.f32.xlu0 %v578
      %v580 = vpop.xlane.xlu0 %579
      %v581 = vsel %vm574, %v560, -inf
      %582 = vmax.xlane.f32.xlu0 %v581
      %v583 = vpop.xlane.xlu0 %582
      %v584 = vsel %vm574, %v561, -inf
      %585 = vmax.xlane.f32.xlu0 %v584
      %v586 = vpop.xlane.xlu0 %585
      %v587 = vsel %vm574, %v562, -inf
      %588 = vmax.xlane.f32.xlu0 %v587
      %v589 = vpop.xlane.xlu0 %588
      %v590 = vsel %vm574, %v563, -inf
      %591 = vmax.xlane.f32.xlu0 %v590
      %v592 = vpop.xlane.xlu0 %591
      %v593 = vsel %vm574, %v564, -inf
      %594 = vmax.xlane.f32.xlu0 %v593
      %v595 = vpop.xlane.xlu0 %594
      %v596 = vsel %vm574, %v565, -inf
      %597 = vmax.xlane.f32.xlu0 %v596
      %v598 = vpop.xlane.xlu0 %597
      %v599 = vsel %vm574, %v566, -inf
      %600 = vmax.xlane.f32.xlu0 %v599
      %v601 = vpop.xlane.xlu0 %600
      %v602 = vsel %vm574, %v567, -inf
      %603 = vmax.xlane.f32.xlu0 %v602
      %v604 = vpop.xlane.xlu0 %603
      %v605 = vsel %vm574, %v568, -inf
      %606 = vmax.xlane.f32.xlu0 %v605
      %v607 = vpop.xlane.xlu0 %606
      %v608 = vsel %vm574, %v569, -inf
      %609 = vmax.xlane.f32.xlu0 %v608
      %v610 = vpop.xlane.xlu0 %609
      %v611 = vsel %vm574, %v570, -inf
      %612 = vmax.xlane.f32.xlu0 %v611
      %v613 = vpop.xlane.xlu0 %612
      %v614 = vsel %vm574, %v571, -inf
      %615 = vmax.xlane.f32.xlu0 %v614
      %v616 = vpop.xlane.xlu0 %615
      %v617 = vsel %vm574, %v572, -inf
      %618 = vmax.xlane.f32.xlu0 %v617
      %v619 = vpop.xlane.xlu0 %618
      %v620 = vsel %vm574, %v573, -inf
      %621 = vmax.xlane.f32.xlu0 %v620
      %v622 = vpop.xlane.xlu0 %621
      %v623 = vsub.f32 %v558, %v577
      %v624 = vsub.f32 %v559, %v580
      %v625 = vsub.f32 %v560, %v583
      %v626 = vsub.f32 %v561, %v586
      %v627 = vsub.f32 %v562, %v589
      %v628 = vsub.f32 %v563, %v592
      %v629 = vsub.f32 %v564, %v595
      %v630 = vsub.f32 %v565, %v598
      %v631 = vsub.f32 %v566, %v601
      %v632 = vsub.f32 %v567, %v604
      %v633 = vsub.f32 %v568, %v607
      %v634 = vsub.f32 %v569, %v610
      %v635 = vsub.f32 %v570, %v613
      %v636 = vsub.f32 %v571, %v616
      %v637 = vsub.f32 %v572, %v619
      %v638 = vsub.f32 %v573, %v622
      %v639 = vmul.f32 %v623, 1.442695
      %v640 = vpow.pop %v639
      %v641 = vmul.f32 %v624, 1.442695
      %v642 = vpow.pop %v641
      %v643 = vmul.f32 %v625, 1.442695
      %v644 = vpow.pop %v643
      %v645 = vmul.f32 %v626, 1.442695
      %v646 = vpow.pop %v645
      %v647 = vmul.f32 %v627, 1.442695
      %v648 = vpow.pop %v647
      %v649 = vmul.f32 %v628, 1.442695
      %v650 = vpow.pop %v649
      %v651 = vmul.f32 %v629, 1.442695
      %v652 = vpow.pop %v651
      %v653 = vmul.f32 %v630, 1.442695
      %v654 = vpow.pop %v653
      %v655 = vmul.f32 %v631, 1.442695
      %v656 = vpow.pop %v655
      %v657 = vmul.f32 %v632, 1.442695
      %v658 = vpow.pop %v657
      %v659 = vmul.f32 %v633, 1.442695
      %v660 = vpow.pop %v659
      %v661 = vmul.f32 %v634, 1.442695
      %v662 = vpow.pop %v661
      %v663 = vmul.f32 %v635, 1.442695
      %v664 = vpow.pop %v663
      %v665 = vmul.f32 %v636, 1.442695
      %v666 = vpow.pop %v665
      %v667 = vmul.f32 %v637, 1.442695
      %v668 = vpow.pop %v667
      %v669 = vmul.f32 %v638, 1.442695
      %v670 = vpow.pop %v669
      %v671 = vsel %vm574, %v640, 0.0
      %672 = vadd.xlane.f32.xlu0 %v671
      %v673 = vpop.xlane.xlu0 %672
      %v674 = vsel %vm574, %v642, 0.0
      %675 = vadd.xlane.f32.xlu0 %v674
      %v676 = vpop.xlane.xlu0 %675
      %v677 = vsel %vm574, %v644, 0.0
      %678 = vadd.xlane.f32.xlu0 %v677
      %v679 = vpop.xlane.xlu0 %678
      %v680 = vsel %vm574, %v646, 0.0
      %681 = vadd.xlane.f32.xlu0 %v680
      %v682 = vpop.xlane.xlu0 %681
      %v683 = vsel %vm574, %v648, 0.0
      %684 = vadd.xlane.f32.xlu0 %v683
      %v685 = vpop.xlane.xlu0 %684
      %v686 = vsel %vm574, %v650, 0.0
      %687 = vadd.xlane.f32.xlu0 %v686
      %v688 = vpop.xlane.xlu0 %687
      %v689 = vsel %vm574, %v652, 0.0
      %690 = vadd.xlane.f32.xlu0 %v689
      %v691 = vpop.xlane.xlu0 %690
      %v692 = vsel %vm574, %v654, 0.0
      %693 = vadd.xlane.f32.xlu0 %v692
      %v694 = vpop.xlane.xlu0 %693
      %v695 = vsel %vm574, %v656, 0.0
      %696 = vadd.xlane.f32.xlu0 %v695
      %v697 = vpop.xlane.xlu0 %696
      %v698 = vsel %vm574, %v658, 0.0
      %699 = vadd.xlane.f32.xlu0 %v698
      %v700 = vpop.xlane.xlu0 %699
      %v701 = vsel %vm574, %v660, 0.0
      %702 = vadd.xlane.f32.xlu0 %v701
      %v703 = vpop.xlane.xlu0 %702
      %v704 = vsel %vm574, %v662, 0.0
      %705 = vadd.xlane.f32.xlu0 %v704
      %v706 = vpop.xlane.xlu0 %705
      %v707 = vsel %vm574, %v664, 0.0
      %708 = vadd.xlane.f32.xlu0 %v707
      %v709 = vpop.xlane.xlu0 %708
      %v710 = vsel %vm574, %v666, 0.0
      %711 = vadd.xlane.f32.xlu0 %v710
      %v712 = vpop.xlane.xlu0 %711
      %v713 = vsel %vm574, %v668, 0.0
      %714 = vadd.xlane.f32.xlu0 %v713
      %v715 = vpop.xlane.xlu0 %714
      %v716 = vsel %vm574, %v670, 0.0
      %717 = vadd.xlane.f32.xlu0 %v716
      %v718 = vpop.xlane.xlu0 %717
      %v719 = vrcp.pop %v673
      %v720 = vrcp.pop %v676
      %v721 = vrcp.pop %v679
      %v722 = vrcp.pop %v682
      %v723 = vrcp.pop %v685
      %v724 = vrcp.pop %v688
      %v725 = vrcp.pop %v691
      %v726 = vrcp.pop %v694
      %v727 = vrcp.pop %v697
      %v728 = vrcp.pop %v700
      %v729 = vrcp.pop %v703
      %v730 = vrcp.pop %v706
      %v731 = vrcp.pop %v709
      %v732 = vrcp.pop %v712
      %v733 = vrcp.pop %v715
      %v734 = vrcp.pop %v718
      %v735 = vmul.f32 %v640, %v719
      %v736 = vmul.f32 %v642, %v720
      %v737 = vmul.f32 %v644, %v721
      %v738 = vmul.f32 %v646, %v722
      %v739 = vmul.f32 %v648, %v723
      %v740 = vmul.f32 %v650, %v724
      %v741 = vmul.f32 %v652, %v725
      %v742 = vmul.f32 %v654, %v726
      %v743 = vmul.f32 %v656, %v727
      %v744 = vmul.f32 %v658, %v728
      %v745 = vmul.f32 %v660, %v729
      %v746 = vmul.f32 %v662, %v730
      %v747 = vmul.f32 %v664, %v731
      %v748 = vmul.f32 %v666, %v732
      %v749 = vmul.f32 %v668, %v733
      %v750 = vmul.f32 %v670, %v734
      %v751 = vpack.c.bf16 %v735, %v735
      %v752 = vpack.c.bf16 %v736, %v736
      %v753 = vpack.c.bf16 %v737, %v737
      %v754 = vpack.c.bf16 %v738, %v738
      %v755 = vpack.c.bf16 %v739, %v739
      %v756 = vpack.c.bf16 %v740, %v740
      %v757 = vpack.c.bf16 %v741, %v741
      %v758 = vpack.c.bf16 %v742, %v742
      %v759 = vpack.c.bf16 %v743, %v743
      %v760 = vpack.c.bf16 %v744, %v744
      %v761 = vpack.c.bf16 %v745, %v745
      %v762 = vpack.c.bf16 %v746, %v746
      %v763 = vpack.c.bf16 %v747, %v747
      %v764 = vpack.c.bf16 %v748, %v748
      %v765 = vpack.c.bf16 %v749, %v749
      %v766 = vpack.c.bf16 %v750, %v750
      %v769 = vunpack.c.l.b16 %v751
      %v770 = vunpack.c.l.b16 %v752
      %v771 = vpack.c.b16 %v770, %v769
      %v774 = vunpack.c.l.b16 %v291
      %v775 = vunpack.c.l.b16 %v292
      %v776 = vpack.c.b16 %v775, %v774
      %v779 = vsel %vm574, %v771, 0
      %781 = vmatpush.bf16.msra.mxu0 0
      %782 = vmatpush.bf16.msra.mxu0 0
      %783 = vmatpush.bf16.msra.mxu0 0
      %784 = vmatpush.bf16.msra.mxu0 0
      %785 = vmatpush.bf16.msra.mxu0 0
      %786 = vmatpush.bf16.msra.mxu0 0
      %787 = vmatpush.bf16.msra.mxu0 0
      %788 = vmatpush.bf16.msra.mxu0 %v776
      %789 = vmatmul.bf16.gmra.mxu0 %v779
      %v790 = vpop.f32.mrf.mxu0
      %v791 = vadd.f32 0.0, %v790
      %v792 = vpop.f32.mrf.mxu0
      %v793 = vadd.f32 0.0, %v792
      %794 = vdwg.mxu0
      %v797 = vunpack.c.l.b16 %v753
      %v798 = vunpack.c.l.b16 %v754
      %v799 = vpack.c.b16 %v798, %v797
      %v802 = vunpack.c.l.b16 %v293
      %v803 = vunpack.c.l.b16 %v294
      %v804 = vpack.c.b16 %v803, %v802
      %v807 = vsel %vm574, %v799, 0
      %809 = vmatpush.bf16.msra.mxu0 0
      %810 = vmatpush.bf16.msra.mxu0 0
      %811 = vmatpush.bf16.msra.mxu0 0
      %812 = vmatpush.bf16.msra.mxu0 0
      %813 = vmatpush.bf16.msra.mxu0 0
      %814 = vmatpush.bf16.msra.mxu0 0
      %815 = vmatpush.bf16.msra.mxu0 0
      %816 = vmatpush.bf16.msra.mxu0 %v804
      %817 = vmatmul.bf16.gmra.mxu0 %v807
      %v818 = vpop.f32.mrf.mxu0
      %v819 = vadd.f32 0.0, %v818
      %v820 = vpop.f32.mrf.mxu0
      %v821 = vadd.f32 0.0, %v820
      %822 = vdwg.mxu0
      %v825 = vunpack.c.l.b16 %v755
      %v826 = vunpack.c.l.b16 %v756
      %v827 = vpack.c.b16 %v826, %v825
      %v830 = vunpack.c.l.b16 %v295
      %v831 = vunpack.c.l.b16 %v296
      %v832 = vpack.c.b16 %v831, %v830
      %v835 = vsel %vm574, %v827, 0
      %837 = vmatpush.bf16.msra.mxu0 0
      %838 = vmatpush.bf16.msra.mxu0 0
      %839 = vmatpush.bf16.msra.mxu0 0
      %840 = vmatpush.bf16.msra.mxu0 0
      %841 = vmatpush.bf16.msra.mxu0 0
      %842 = vmatpush.bf16.msra.mxu0 0
      %843 = vmatpush.bf16.msra.mxu0 0
      %844 = vmatpush.bf16.msra.mxu0 %v832
      %845 = vmatmul.bf16.gmra.mxu0 %v835
      %v846 = vpop.f32.mrf.mxu0
      %v847 = vadd.f32 0.0, %v846
      %v848 = vpop.f32.mrf.mxu0
      %v849 = vadd.f32 0.0, %v848
      %850 = vdwg.mxu0
      %v853 = vunpack.c.l.b16 %v757
      %v854 = vunpack.c.l.b16 %v758
      %v855 = vpack.c.b16 %v854, %v853
      %v858 = vunpack.c.l.b16 %v297
      %v859 = vunpack.c.l.b16 %v298
      %v860 = vpack.c.b16 %v859, %v858
      %v863 = vsel %vm574, %v855, 0
      %865 = vmatpush.bf16.msra.mxu0 0
      %866 = vmatpush.bf16.msra.mxu0 0
      %867 = vmatpush.bf16.msra.mxu0 0
      %868 = vmatpush.bf16.msra.mxu0 0
      %869 = vmatpush.bf16.msra.mxu0 0
      %870 = vmatpush.bf16.msra.mxu0 0
      %871 = vmatpush.bf16.msra.mxu0 0
      %872 = vmatpush.bf16.msra.mxu0 %v860
      %873 = vmatmul.bf16.gmra.mxu0 %v863
      %v874 = vpop.f32.mrf.mxu0
      %v875 = vadd.f32 0.0, %v874
      %v876 = vpop.f32.mrf.mxu0
      %v877 = vadd.f32 0.0, %v876
      %878 = vdwg.mxu0
      %v881 = vunpack.c.l.b16 %v759
      %v882 = vunpack.c.l.b16 %v760
      %v883 = vpack.c.b16 %v882, %v881
      %v886 = vunpack.c.l.b16 %v299
      %v887 = vunpack.c.l.b16 %v300
      %v888 = vpack.c.b16 %v887, %v886
      %v891 = vsel %vm574, %v883, 0
      %893 = vmatpush.bf16.msra.mxu0 0
      %894 = vmatpush.bf16.msra.mxu0 0
      %895 = vmatpush.bf16.msra.mxu0 0
      %896 = vmatpush.bf16.msra.mxu0 0
      %897 = vmatpush.bf16.msra.mxu0 0
      %898 = vmatpush.bf16.msra.mxu0 0
      %899 = vmatpush.bf16.msra.mxu0 0
      %900 = vmatpush.bf16.msra.mxu0 %v888
      %901 = vmatmul.bf16.gmra.mxu0 %v891
      %v902 = vpop.f32.mrf.mxu0
      %v903 = vadd.f32 0.0, %v902
      %v904 = vpop.f32.mrf.mxu0
      %v905 = vadd.f32 0.0, %v904
      %906 = vdwg.mxu0
      %v909 = vunpack.c.l.b16 %v761
      %v910 = vunpack.c.l.b16 %v762
      %v911 = vpack.c.b16 %v910, %v909
      %v914 = vunpack.c.l.b16 %v301
      %v915 = vunpack.c.l.b16 %v302
      %v916 = vpack.c.b16 %v915, %v914
      %v919 = vsel %vm574, %v911, 0
      %921 = vmatpush.bf16.msra.mxu0 0
      %922 = vmatpush.bf16.msra.mxu0 0
      %923 = vmatpush.bf16.msra.mxu0 0
      %924 = vmatpush.bf16.msra.mxu0 0
      %925 = vmatpush.bf16.msra.mxu0 0
      %926 = vmatpush.bf16.msra.mxu0 0
      %927 = vmatpush.bf16.msra.mxu0 0
      %928 = vmatpush.bf16.msra.mxu0 %v916
      %929 = vmatmul.bf16.gmra.mxu0 %v919
      %v930 = vpop.f32.mrf.mxu0
      %v931 = vadd.f32 0.0, %v930
      %v932 = vpop.f32.mrf.mxu0
      %v933 = vadd.f32 0.0, %v932
      %934 = vdwg.mxu0
      %v937 = vunpack.c.l.b16 %v763
      %v938 = vunpack.c.l.b16 %v764
      %v939 = vpack.c.b16 %v938, %v937
      %v942 = vunpack.c.l.b16 %v303
      %v943 = vunpack.c.l.b16 %v304
      %v944 = vpack.c.b16 %v943, %v942
      %v947 = vsel %vm574, %v939, 0
      %949 = vmatpush.bf16.msra.mxu0 0
      %950 = vmatpush.bf16.msra.mxu0 0
      %951 = vmatpush.bf16.msra.mxu0 0
      %952 = vmatpush.bf16.msra.mxu0 0
      %953 = vmatpush.bf16.msra.mxu0 0
      %954 = vmatpush.bf16.msra.mxu0 0
      %955 = vmatpush.bf16.msra.mxu0 0
      %956 = vmatpush.bf16.msra.mxu0 %v944
      %957 = vmatmul.bf16.gmra.mxu0 %v947
      %v958 = vpop.f32.mrf.mxu0
      %v959 = vadd.f32 0.0, %v958
      %v960 = vpop.f32.mrf.mxu0
      %v961 = vadd.f32 0.0, %v960
      %962 = vdwg.mxu0
      %v965 = vunpack.c.l.b16 %v765
      %v966 = vunpack.c.l.b16 %v766
      %v967 = vpack.c.b16 %v966, %v965
      %v970 = vunpack.c.l.b16 %v305
      %v971 = vunpack.c.l.b16 %v306
      %v972 = vpack.c.b16 %v971, %v970
      %v975 = vsel %vm574, %v967, 0
      %977 = vmatpush.bf16.msra.mxu0 0
      %978 = vmatpush.bf16.msra.mxu0 0
      %979 = vmatpush.bf16.msra.mxu0 0
      %980 = vmatpush.bf16.msra.mxu0 0
      %981 = vmatpush.bf16.msra.mxu0 0
      %982 = vmatpush.bf16.msra.mxu0 0
      %983 = vmatpush.bf16.msra.mxu0 0
      %984 = vmatpush.bf16.msra.mxu0 %v972
      %985 = vmatmul.bf16.gmra.mxu0 %v975
      %v986 = vpop.f32.mrf.mxu0
      %v987 = vadd.f32 0.0, %v986
      %v988 = vpop.f32.mrf.mxu0
      %v989 = vadd.f32 0.0, %v988
      %990 = vdwg.mxu0
      %v991 = vpack.c.bf16 %v791, %v791
      %v992 = vpack.c.bf16 %v793, %v793
      %v993 = vpack.c.bf16 %v819, %v819
      %v994 = vpack.c.bf16 %v821, %v821
      %v995 = vpack.c.bf16 %v847, %v847
      %v996 = vpack.c.bf16 %v849, %v849
      %v997 = vpack.c.bf16 %v875, %v875
      %v998 = vpack.c.bf16 %v877, %v877
      %v999 = vpack.c.bf16 %v903, %v903
      %v1000 = vpack.c.bf16 %v905, %v905
      %v1001 = vpack.c.bf16 %v931, %v931
      %v1002 = vpack.c.bf16 %v933, %v933
      %v1003 = vpack.c.bf16 %v959, %v959
      %v1004 = vpack.c.bf16 %v961, %v961
      %v1005 = vpack.c.bf16 %v987, %v987
      %v1006 = vpack.c.bf16 %v989, %v989
      %vm1007 = vcmask 60416
      %1008 = vst.msk [vmem:[%s257] sm:$0xf] %vm1007, %v991
      %1009 = vst.msk [vmem:[%s257 + $0x4] sm:$0xf] %vm1007, %v992
      %1010 = vst.msk [vmem:[%s257 + $0x8] sm:$0xf] %vm1007, %v993
      %1011 = vst.msk [vmem:[%s257 + $0xc] sm:$0xf] %vm1007, %v994
      %1012 = vst.msk [vmem:[%s257 + $0x10] sm:$0xf] %vm1007, %v995
      %1013 = vst.msk [vmem:[%s257 + $0x14] sm:$0xf] %vm1007, %v996
      %1014 = vst.msk [vmem:[%s257 + $0x18] sm:$0xf] %vm1007, %v997
      %1015 = vst.msk [vmem:[%s257 + $0x1c] sm:$0xf] %vm1007, %v998
      %1016 = vst.msk [vmem:[%s257 + $0x20] sm:$0xf] %vm1007, %v999
      %1017 = vst.msk [vmem:[%s257 + $0x24] sm:$0xf] %vm1007, %v1000
      %1018 = vst.msk [vmem:[%s257 + $0x28] sm:$0xf] %vm1007, %v1001
      %1019 = vst.msk [vmem:[%s257 + $0x2c] sm:$0xf] %vm1007, %v1002
      %1020 = vst.msk [vmem:[%s257 + $0x30] sm:$0xf] %vm1007, %v1003
      %1021 = vst.msk [vmem:[%s257 + $0x34] sm:$0xf] %vm1007, %v1004
      %1022 = vst.msk [vmem:[%s257 + $0x38] sm:$0xf] %vm1007, %v1005
      %1023 = vst.msk [vmem:[%s257 + $0x3c] sm:$0xf] %vm1007, %v1006
      %p1024 = scmp.lt.s32.totalorder %s15, 1
      %s1025 = scalar_select %p1024, %s15, 1
      %s1026 = smul.addr %s1025, 16
      %s1027 = smul.addr %s1026, 4
      %s1028 = scalar_lea.vmem %s4, %s1027
      // Predicated region
      $region37: #{encoder_layer.4} parent=35 // pred_check
        %p1029 = pneg %p137
      $region38: #{encoder_layer.4} parent=35 // pred_check_branch
        %1031 = sbr.rel (%p1029) target = $region40
      $region39: #{encoder_layer.4} parent=35 // pred_region
        _
      $region40: #{encoder_layer.4} parent=35 // pred_fallthru
        _
    $region36: #{encoder_layer.4} parent=5 // pred_fallthru
      _
    %p1032 = scmp.le.s32.totalorder 2, %s10
    // Predicated region
    $region41: #{encoder_layer.4} parent=5 // pred_check
      %p1033 = pneg %p1032
    $region42: #{encoder_layer.4} parent=5 // pred_check_branch
      %1035 = sbr.rel (%p1033) target = $region44
    $region43: #{encoder_layer.4} parent=5 // pred_region
      %s1036 = ssub.s32 %s10, 2
      // Predicated region
      $region45: #{encoder_layer.4} parent=43 // pred_check
        %p1037 = pneg %p143
      $region46: #{encoder_layer.4} parent=43 // pred_check_branch
        %1039 = sbr.rel (%p1037) target = $region48
      $region47: #{encoder_layer.4} parent=43 // pred_region
        %p1040 = scmp.lt.s32.totalorder %s16, 1
        %s1041 = scalar_select %p1040, %s16, 1
        %s1042 = smul.addr %s1041, 16
        %s1043 = smul.addr %s1042, 4
        %s1044 = scalar_lea.vmem %s4, %s1043
      $region48: #{encoder_layer.4} parent=43 // pred_fallthru
        _
    $region44: #{encoder_layer.4} parent=5 // pred_fallthru
      _
  $region6: #{encoder_layer.4} parent=0 // loop_footer
    %s14 = sadd.s32 1, %s10
  $region7: #{encoder_layer.4} parent=0 // loop_footer_branch
    %9 = sbr.rel target = $region3
  $region8: #{encoder_layer.4} parent=0 // loop_exit
    _

// kernel: encoder_layer.5
$region0: #{encoder_layer.5}
  #allocation0 [shape = 'u32[]', space=smem, size = 0x4, offset = 0x4, fixed_abs, tag = 'smem constant byte address 0x4 - core index']
  #allocation1 [shape = 'u32[72,128]{1,0:T(1,128)}', space=vmem, size = 0x9000, scoped, tag = 'internal scratch']
  %s0 = inlined_call_operand.vmem [shape: bf16[32,64], index: 0, kind: input, shape index: {}]
  %s1 = inlined_call_operand.vmem [shape: f32[32,64], index: 1, kind: input, shape index: {}]
  %s2 = inlined_call_operand.vmem [shape: bf16[64,64], index: 2, kind: input, shape index: {}]
  %s3 = inlined_call_operand.vmem [shape: f32[1,64], index: 3, kind: input, shape index: {}]
  %s4 = inlined_call_operand.vmem [shape: f32[1,64], index: 4, kind: input, shape index: {}]
  %s5 = inlined_call_operand.vmem [shape: bf16[64,128], index: 5, kind: input, shape index: {}]
  %s6 = inlined_call_operand.vmem [shape: f32[1,128], index: 6, kind: input, shape index: {}]
  %s7 = inlined_call_operand.vmem [shape: bf16[128,64], index: 7, kind: input, shape index: {}]
  %s8 = inlined_call_operand.vmem [shape: f32[1,64], index: 8, kind: input, shape index: {}]
  %s9 = inlined_call_operand.hbm [shape: f32[32,64], index: 9, kind: output, shape index: {}]
  %s10 = sld [smem:[#allocation0]]
  $region46: #{encoder_layer.5} parent=0
    _
  %s12 = ssub.s32 1, %s10
  %s13 = scalar_select 0, %s12, %s10
  $region1: #{encoder_layer.5} parent=0
    #allocation2 [shape = 'u8[16384]{0}', space=vmem, size = 0x4000, scoped, tag = 'output window, operand 0, single buffered']
    #allocation3 [shape = 's32[1]{0}', space=sflag, size = 0x4, scoped, tag = 'scoped memory for encoder_layer.5']
    %14 = vsyncpa [#allocation3], 0
    // Predicated region
    $region2: #{encoder_layer.5} parent=1 // pred_check
      _
    $region3: #{encoder_layer.5} parent=1 // pred_check_branch
      %16 = sbr.rel (0) target = $region5
    $region4: #{encoder_layer.5} parent=1 // pred_region
      _
    $region5: #{encoder_layer.5} parent=1 // pred_fallthru
      _
    // Predicated region
    $region6: #{encoder_layer.5} parent=1 // pred_check
      _
    $region7: #{encoder_layer.5} parent=1 // pred_check_branch
      %18 = sbr.rel (0) target = $region9
    $region8: #{encoder_layer.5} parent=1 // pred_region
      _
    $region9: #{encoder_layer.5} parent=1 // pred_fallthru
      _
    // Predicated region
    $region10: #{encoder_layer.5} parent=1 // pred_check
      _
    $region11: #{encoder_layer.5} parent=1 // pred_check_branch
      %20 = sbr.rel (0) target = $region13
    $region12: #{encoder_layer.5} parent=1 // pred_region
      _
    $region13: #{encoder_layer.5} parent=1 // pred_fallthru
      _
    // Predicated region
    $region14: #{encoder_layer.5} parent=1 // pred_check
      _
    $region15: #{encoder_layer.5} parent=1 // pred_check_branch
      %22 = sbr.rel (0) target = $region17
    $region16: #{encoder_layer.5} parent=1 // pred_region
      _
    $region17: #{encoder_layer.5} parent=1 // pred_fallthru
      _
    // Predicated region
    $region18: #{encoder_layer.5} parent=1 // pred_check
      _
    $region19: #{encoder_layer.5} parent=1 // pred_check_branch
      %24 = sbr.rel (0) target = $region21
    $region20: #{encoder_layer.5} parent=1 // pred_region
      _
    $region21: #{encoder_layer.5} parent=1 // pred_fallthru
      _
    // Predicated region
    $region22: #{encoder_layer.5} parent=1 // pred_check
      _
    $region23: #{encoder_layer.5} parent=1 // pred_check_branch
      %26 = sbr.rel (0) target = $region25
    $region24: #{encoder_layer.5} parent=1 // pred_region
      _
    $region25: #{encoder_layer.5} parent=1 // pred_fallthru
      _
    // Predicated region
    $region26: #{encoder_layer.5} parent=1 // pred_check
      _
    $region27: #{encoder_layer.5} parent=1 // pred_check_branch
      %28 = sbr.rel (0) target = $region29
    $region28: #{encoder_layer.5} parent=1 // pred_region
      _
    $region29: #{encoder_layer.5} parent=1 // pred_fallthru
      _
    // Predicated region
    $region30: #{encoder_layer.5} parent=1 // pred_check
      _
    $region31: #{encoder_layer.5} parent=1 // pred_check_branch
      %30 = sbr.rel (0) target = $region33
    $region32: #{encoder_layer.5} parent=1 // pred_region
      _
    $region33: #{encoder_layer.5} parent=1 // pred_fallthru
      _
    // Predicated region
    $region34: #{encoder_layer.5} parent=1 // pred_check
      _
    $region35: #{encoder_layer.5} parent=1 // pred_check_branch
      %32 = sbr.rel (0) target = $region37
    $region36: #{encoder_layer.5} parent=1 // pred_region
      _
    $region37: #{encoder_layer.5} parent=1 // pred_fallthru
      _
    %v34 = vld [vmem:[%s0] sm:$0xf]
    %v35 = vld [vmem:[%s0 + $0x4] sm:$0xf]
    %v36 = vld [vmem:[%s0 + $0x8] sm:$0xf]
    %v37 = vld [vmem:[%s0 + $0xc] sm:$0xf]
    %v38 = vld [vmem:[%s2] sm:$0xf]
    %v39 = vld [vmem:[%s2 + $0x4] sm:$0xf]
    %v40 = vld [vmem:[%s2 + $0x8] sm:$0xf]
    %v41 = vld [vmem:[%s2 + $0xc] sm:$0xf]
    %v42 = vld [vmem:[%s2 + $0x10] sm:$0xf]
    %v43 = vld [vmem:[%s2 + $0x14] sm:$0xf]
    %v44 = vld [vmem:[%s2 + $0x18] sm:$0xf]
    %v45 = vld [vmem:[%s2 + $0x1c] sm:$0xf]
    %v50 = vunpack.c.l.b16 %v34
    %v51 = vunpack.c.l.b16 %v35
    %v52 = vunpack.c.l.b16 %v36
    %v53 = vunpack.c.l.b16 %v37
    %v54 = vpack.c.b16 %v51, %v50
    %v55 = vpack.c.b16 %v53, %v52
    %v64 = vunpack.c.l.b16 %v38
    %v65 = vunpack.c.l.b16 %v39
    %v66 = vunpack.c.l.b16 %v40
    %v67 = vunpack.c.l.b16 %v41
    %v68 = vunpack.c.l.b16 %v42
    %v69 = vunpack.c.l.b16 %v43
    %v70 = vunpack.c.l.b16 %v44
    %v71 = vunpack.c.l.b16 %v45
    %v72 = vpack.c.b16 %v65, %v64
    %v73 = vpack.c.b16 %v67, %v66
    %v74 = vpack.c.b16 %v69, %v68
    %v75 = vpack.c.b16 %v71, %v70
    %vm80 = vcmask 523264
    %v82 = vsel %vm80, %v54, 0
    %v85 = vsel %vm80, %v55, 0
    %87 = vmatpush.bf16.msra.mxu0 0
    %88 = vmatpush.bf16.msra.mxu0 0
    %89 = vmatpush.bf16.msra.mxu0 0
    %90 = vmatpush.bf16.msra.mxu0 0
    %91 = vmatpush.bf16.msra.mxu0 %v75
    %92 = vmatpush.bf16.msra.mxu0 %v74
    %93 = vmatpush.bf16.msra.mxu0 %v73
    %94 = vmatpush.bf16.msra.mxu0 %v72
    %95 = vmatmul.bf16.gmra.mxu0 %v82
    %v96 = vpop.f32.mrf.mxu0
    %v97 = vadd.f32 0.0, %v96
    %v98 = vpop.f32.mrf.mxu0
    %v99 = vadd.f32 0.0, %v98
    %100 = vmatmul.bf16.gmra.mxu0 %v85
    %v101 = vpop.f32.mrf.mxu0
    %v102 = vadd.f32 0.0, %v101
    %v103 = vpop.f32.mrf.mxu0
    %v104 = vadd.f32 0.0, %v103
    %105 = vdwg.mxu0
    %v106 = vld [vmem:[%s1] sm:$0xff]
    %v107 = vld [vmem:[%s1 + $0x8] sm:$0xff]
    %v108 = vld [vmem:[%s1 + $0x10] sm:$0xff]
    %v109 = vld [vmem:[%s1 + $0x18] sm:$0xff]
    %v110 = vadd.f32 %v106, %v97
    %v111 = vadd.f32 %v107, %v99
    %v112 = vadd.f32 %v108, %v102
    %v113 = vadd.f32 %v109, %v104
    %v114 = vld [vmem:[%s3] sm:$0x1]
    %v115 = vld [vmem:[%s4] sm:$0x1]
    %v116 = vsel %vm80, %v110, 0.0
    %117 = vadd.xlane.f32.xlu0 %v116
    %v118 = vpop.xlane.xlu0 %117
    %v119 = vsel %vm80, %v111, 0.0
    %120 = vadd.xlane.f32.xlu0 %v119
    %v121 = vpop.xlane.xlu0 %120
    %v122 = vsel %vm80, %v112, 0.0
    %123 = vadd.xlane.f32.xlu0 %v122
    %v124 = vpop.xlane.xlu0 %123
    %v125 = vsel %vm80, %v113, 0.0
    %126 = vadd.xlane.f32.xlu0 %v125
    %v127 = vpop.xlane.xlu0 %126
    %v128 = vrcp.pop 64.0
    %v129 = vmul.f32 64.0, %v128
    %v130 = vsub.f32 1.0, %v129
    %v131 = vmul.f32 %v128, %v130
    %v132 = vadd.f32 %v128, %v131
    %vm133 = vweird.f32 %v128
    %v134 = vsel %vm133, %v128, %v132
    %v135 = vmul.f32 %v118, %v134
    %v136 = vmul.f32 %v121, %v134
    %v137 = vmul.f32 %v124, %v134
    %v138 = vmul.f32 %v127, %v134
    %v139 = vsub.f32 %v110, %v135
    %v140 = vsub.f32 %v111, %v136
    %v141 = vsub.f32 %v112, %v137
    %v142 = vsub.f32 %v113, %v138
    %v143 = vmul.f32 %v139, %v139
    %v144 = vmul.f32 %v140, %v140
    %v145 = vmul.f32 %v141, %v141
    %v146 = vmul.f32 %v142, %v142
    %v147 = vsel %vm80, %v143, 0.0
    %148 = vadd.xlane.f32.xlu0 %v147
    %v149 = vpop.xlane.xlu0 %148
    %v150 = vsel %vm80, %v144, 0.0
    %151 = vadd.xlane.f32.xlu0 %v150
    %v152 = vpop.xlane.xlu0 %151
    %v153 = vsel %vm80, %v145, 0.0
    %154 = vadd.xlane.f32.xlu0 %v153
    %v155 = vpop.xlane.xlu0 %154
    %v156 = vsel %vm80, %v146, 0.0
    %157 = vadd.xlane.f32.xlu0 %v156
    %v158 = vpop.xlane.xlu0 %157
    %v159 = vmul.f32 %v149, %v134
    %v160 = vmul.f32 %v152, %v134
    %v161 = vmul.f32 %v155, %v134
    %v162 = vmul.f32 %v158, %v134
    %v163 = vadd.f32 %v159, 1e-06
    %v164 = vadd.f32 %v160, 1e-06
    %v165 = vadd.f32 %v161, 1e-06
    %v166 = vadd.f32 %v162, 1e-06
    %v167 = vrsqrt.pop %v163
    %v168 = vmul.f32 %v167, %v163
    %v169 = vmul.f32 %v168, %v167
    %v170 = vmul.f32 0.5, %v169
    %v171 = vsub.f32 1.5, %v170
    %v172 = vmul.f32 %v167, %v171
    %vm173 = vweird.f32 %v163
    %vm174 = vweird.f32 %v167
    %vm175 = vmor %vm173, %vm174
    %v176 = vsel %vm175, %v167, %v172
    %v177 = vrsqrt.pop %v164
    %v178 = vmul.f32 %v177, %v164
    %v179 = vmul.f32 %v178, %v177
    %v180 = vmul.f32 0.5, %v179
    %v181 = vsub.f32 1.5, %v180
    %v182 = vmul.f32 %v177, %v181
    %vm183 = vweird.f32 %v164
    %vm184 = vweird.f32 %v177
    %vm185 = vmor %vm183, %vm184
    %v186 = vsel %vm185, %v177, %v182
    %v187 = vrsqrt.pop %v165
    %v188 = vmul.f32 %v187, %v165
    %v189 = vmul.f32 %v188, %v187
    %v190 = vmul.f32 0.5, %v189
    %v191 = vsub.f32 1.5, %v190
    %v192 = vmul.f32 %v187, %v191
    %vm193 = vweird.f32 %v165
    %vm194 = vweird.f32 %v187
    %vm195 = vmor %vm193, %vm194
    %v196 = vsel %vm195, %v187, %v192
    %v197 = vrsqrt.pop %v166
    %v198 = vmul.f32 %v197, %v166
    %v199 = vmul.f32 %v198, %v197
    %v200 = vmul.f32 0.5, %v199
    %v201 = vsub.f32 1.5, %v200
    %v202 = vmul.f32 %v197, %v201
    %vm203 = vweird.f32 %v166
    %vm204 = vweird.f32 %v197
    %vm205 = vmor %vm203, %vm204
    %v206 = vsel %vm205, %v197, %v202
    %v207 = vmul.f32 %v139, %v176
    %v208 = vmul.f32 %v140, %v186
    %v209 = vmul.f32 %v141, %v196
    %v210 = vmul.f32 %v142, %v206
    %v212 = vperm.slane %v114, 0
    %v214 = vmul.f32 %v207, %v212
    %v215 = vmul.f32 %v208, %v212
    %v216 = vmul.f32 %v209, %v212
    %v217 = vmul.f32 %v210, %v212
    %v219 = vperm.slane %v115, 0
    %v221 = vadd.f32 %v214, %v219
    %v222 = vadd.f32 %v215, %v219
    %v223 = vadd.f32 %v216, %v219
    %v224 = vadd.f32 %v217, %v219
    %v225 = vpack.c.bf16 %v222, %v221
    %v226 = vpack.c.bf16 %v224, %v223
    %v227 = vld [vmem:[%s5] sm:$0xf]
    %v228 = vld [vmem:[%s5 + $0x4] sm:$0xf]
    %v229 = vld [vmem:[%s5 + $0x8] sm:$0xf]
    %v230 = vld [vmem:[%s5 + $0xc] sm:$0xf]
    %v231 = vld [vmem:[%s5 + $0x10] sm:$0xf]
    %v232 = vld [vmem:[%s5 + $0x14] sm:$0xf]
    %v233 = vld [vmem:[%s5 + $0x18] sm:$0xf]
    %v234 = vld [vmem:[%s5 + $0x1c] sm:$0xf]
    %v235 = vld [vmem:[%s6] sm:$0x1]
    %v237 = vperm.slane %v235, 0
    %v247 = vunpack.c.l.b16 %v227
    %v248 = vunpack.c.l.b16 %v228
    %v249 = vunpack.c.l.b16 %v229
    %v250 = vunpack.c.l.b16 %v230
    %v251 = vunpack.c.l.b16 %v231
    %v252 = vunpack.c.l.b16 %v232
    %v253 = vunpack.c.l.b16 %v233
    %v254 = vunpack.c.l.b16 %v234
    %v255 = vpack.c.b16 %v248, %v247
    %v256 = vpack.c.b16 %v250, %v249
    %v257 = vpack.c.b16 %v252, %v251
    %v258 = vpack.c.b16 %v254, %v253
    %v264 = vsel %vm80, %v225, 0
    %v267 = vsel %vm80, %v226, 0
    %269 = vmatpush.bf16.msra.mxu0 0
    %270 = vmatpush.bf16.msra.mxu0 0
    %271 = vmatpush.bf16.msra.mxu0 0
    %272 = vmatpush.bf16.msra.mxu0 0
    %273 = vmatpush.bf16.msra.mxu0 %v258
    %274 = vmatpush.bf16.msra.mxu0 %v257
    %275 = vmatpush.bf16.msra.mxu0 %v256
    %276 = vmatpush.bf16.msra.mxu0 %v255
    %277 = vmatmul.bf16.gmra.mxu0 %v264
    %v278 = vpop.f32.mrf.mxu0
    %v279 = vadd.f32 %v237, %v278
    %v280 = vpop.f32.mrf.mxu0
    %v281 = vadd.f32 %v237, %v280
    %282 = vmatmul.bf16.gmra.mxu0 %v267
    %v283 = vpop.f32.mrf.mxu0
    %v284 = vadd.f32 %v237, %v283
    %v285 = vpop.f32.mrf.mxu0
    %v286 = vadd.f32 %v237, %v285
    %287 = vdwg.mxu0
    %v288 = vmax.f32 %v279, 0.0
    %v289 = vmax.f32 %v281, 0.0
    %v290 = vmax.f32 %v284, 0.0
    %v291 = vmax.f32 %v286, 0.0
    %v292 = vpack.c.bf16 %v289, %v288
    %v293 = vpack.c.bf16 %v291, %v290
    %v294 = vld [vmem:[%s7] sm:$0xf]
    %v295 = vld [vmem:[%s7 + $0x4] sm:$0xf]
    %v296 = vld [vmem:[%s7 + $0x8] sm:$0xf]
    %v297 = vld [vmem:[%s7 + $0xc] sm:$0xf]
    %v298 = vld [vmem:[%s7 + $0x10] sm:$0xf]
    %v299 = vld [vmem:[%s7 + $0x14] sm:$0xf]
    %v300 = vld [vmem:[%s7 + $0x18] sm:$0xf]
    %v301 = vld [vmem:[%s7 + $0x1c] sm:$0xf]
    %v302 = vld [vmem:[%s7 + $0x20] sm:$0xf]
    %v303 = vld [vmem:[%s7 + $0x24] sm:$0xf]
    %v304 = vld [vmem:[%s7 + $0x28] sm:$0xf]
    %v305 = vld [vmem:[%s7 + $0x2c] sm:$0xf]
    %v306 = vld [vmem:[%s7 + $0x30] sm:$0xf]
    %v307 = vld [vmem:[%s7 + $0x34] sm:$0xf]
    %v308 = vld [vmem:[%s7 + $0x38] sm:$0xf]
    %v309 = vld [vmem:[%s7 + $0x3c] sm:$0xf]
    %v310 = vld [vmem:[%s8] sm:$0x1]
    %v312 = vperm.slane %v310, 0
    %v330 = vunpack.c.l.b16 %v294
    %v331 = vunpack.c.l.b16 %v295
    %v332 = vunpack.c.l.b16 %v296
    %v333 = vunpack.c.l.b16 %v297
    %v334 = vunpack.c.l.b16 %v298
    %v335 = vunpack.c.l.b16 %v299
    %v336 = vunpack.c.l.b16 %v300
    %v337 = vunpack.c.l.b16 %v301
    %v338 = vunpack.c.l.b16 %v302
    %v339 = vunpack.c.l.b16 %v303
    %v340 = vunpack.c.l.b16 %v304
    %v341 = vunpack.c.l.b16 %v305
    %v342 = vunpack.c.l.b16 %v306
    %v343 = vunpack.c.l.b16 %v307
    %v344 = vunpack.c.l.b16 %v308
    %v345 = vunpack.c.l.b16 %v309
    %v346 = vpack.c.b16 %v331, %v330
    %v347 = vpack.c.b16 %v333, %v332
    %v348 = vpack.c.b16 %v335, %v334
    %v349 = vpack.c.b16 %v337, %v336
    %v350 = vpack.c.b16 %v339, %v338
    %v351 = vpack.c.b16 %v341, %v340
    %v352 = vpack.c.b16 %v343, %v342
    %v353 = vpack.c.b16 %v345, %v344
    %362 = vmatpush.bf16.msra.mxu0 %v353
    %363 = vmatpush.bf16.msra.mxu0 %v352
    %364 = vmatpush.bf16.msra.mxu0 %v351
    %365 = vmatpush.bf16.msra.mxu0 %v350
    %366 = vmatpush.bf16.msra.mxu0 %v349
    %367 = vmatpush.bf16.msra.mxu0 %v348
    %368 = vmatpush.bf16.msra.mxu0 %v347
    %369 = vmatpush.bf16.msra.mxu0 %v346
    %370 = vmatmul.bf16.gmra.mxu0 %v292
    %v371 = vpop.f32.mrf.mxu0
    %v372 = vadd.f32 %v312, %v371
    %v373 = vpop.f32.mrf.mxu0
    %v374 = vadd.f32 %v312, %v373
    %375 = vmatmul.bf16.gmra.mxu0 %v293
    %v376 = vpop.f32.mrf.mxu0
    %v377 = vadd.f32 %v312, %v376
    %v378 = vpop.f32.mrf.mxu0
    %v379 = vadd.f32 %v312, %v378
    %380 = vdwg.mxu0
    %v381 = vadd.f32 %v110, %v372
    %v382 = vadd.f32 %v111, %v374
    %v383 = vadd.f32 %v112, %v377
    %v384 = vadd.f32 %v113, %v379
    %385 = vst.msk [vmem:[#allocation2] sm:$0xff] %vm80, %v381
    %386 = vst.msk [vmem:[#allocation2 + $0x8] sm:$0xff] %vm80, %v382
    %387 = vst.msk [vmem:[#allocation2 + $0x10] sm:$0xff] %vm80, %v383
    %388 = vst.msk [vmem:[#allocation2 + $0x18] sm:$0xff] %vm80, %v384
    // Predicated region
    $region38: #{encoder_layer.5} parent=1 // pred_check
      _
    $region39: #{encoder_layer.5} parent=1 // pred_check_branch
      %390 = sbr.rel (0) target = $region41
    $region40: #{encoder_layer.5} parent=1 // pred_region
      %392 = vsyncadd [#allocation3], 0
      %s393 = sshll.u32 [#allocation2], 4
      %s394 = int_to_ptr.vmem [resolvable:$true] %s393
      %s395 = sshll.u32 %s9, 4
      %s396 = int_to_ptr.hbm [resolvable:$true] %s395
      %401 = dma.vmem_to_hbm [thread:$0]  %s394, 512, %s396, [#allocation3], 128, 128, 8
    $region41: #{encoder_layer.5} parent=1 // pred_fallthru
      _
    // Predicated region
    $region42: #{encoder_layer.5} parent=1 // pred_check
      _
    $region43: #{encoder_layer.5} parent=1 // pred_check_branch
      %403 = sbr.rel (0) target = $region45
    $region44: #{encoder_layer.5} parent=1 // pred_region
      %405 = dma.done [#allocation3], 512
    $region45: #{encoder_layer.5} parent=1 // pred_fallthru
      _
    %406 = vsyncpa [#allocation3], 1

</llo_original>
